<compile_context>
chip_gen: v7x
topology: tpu7x:2x2x1
jax: 0.10.0
libtpu: 0.0.40
codegen_flags: <defaults>
</compile_context>

<pallas_src>
import functools
import math

import jax
import jax.numpy as jnp
from jax.experimental import pallas as pl
from jax.experimental.pallas import tpu as pltpu


# ----------------------------- in-kernel math ------------------------------ #

def _layernorm(x, g, b, eps=1e-5):
    # matches torch.nn.LayerNorm (biased variance, eps=1e-5)
    mu = jnp.mean(x, axis=-1, keepdims=True)
    var = jnp.mean((x - mu) ** 2, axis=-1, keepdims=True)
    return (x - mu) * jax.lax.rsqrt(var + eps) * g + b


def _erf(x):
    # Abramowitz & Stegun 7.1.26 polynomial, max abs err ~1.5e-7.
    # TODO(synk): lax.erf has no guaranteed Mosaic lowering; exact-erf GELU is
    # reproduced via this (essentially exact in f32) approximation.
    a1, a2, a3, a4, a5 = (0.254829592, -0.284496736, 1.421413741,
                          -1.453152027, 1.061405429)
    p = 0.3275911
    s = jnp.where(x >= 0.0, 1.0, -1.0)
    ax = jnp.abs(x)
    # approx reciprocal only used here (GELU); softmax uses an exact divide.
    t = pl.reciprocal(1.0 + p * ax, approx=True)
    poly = ((((a5 * t + a4) * t + a3) * t + a2) * t + a1) * t
    return s * (1.0 - poly * jnp.exp(-ax * ax))


def _gelu(x):
    # exact (erf-based) GELU = torch.nn.GELU() default
    return 0.5 * x * (1.0 + _erf(x * (1.0 / math.sqrt(2.0))))


# --------------------------------- kernel ----------------------------------- #

def fused_encoder_kernel(num_heads, head_dim, inv_scale,
                         x_ref, pos_ref,
                         ln1_g, ln1_b, qkv_w, qkv_b, o_w, o_b,
                         ln2_g, ln2_b, fc1_w, fc1_b, fc2_w, fc2_b,
                         fin_g, fin_b,
                         o_ref, acc_sc):
    """One grid step = (batch block bi, encoder layer l)."""
    layer = pl.program_id(1)
    Bt, S, D = x_ref.shape
    H, Hd = num_heads, head_dim
    N = Bt * S
    cdt = qkv_w.dtype                                    # bf16 MXU-input dtype

    # INVARIANT: acc_sc carries the activation across the layer axis.  This is
    # only correct because the layer axis is the LAST ("arbitrary") grid axis
    # and layer==0 re-seeds it per batch block.  Do NOT reorder grid to (L, B).
    @pl.when(layer == 0)
    def _():
        acc_sc[...] = (x_ref[...] + pos_ref[...]).reshape(N, D)

    x = acc_sc[...]                                      # (N, D) f32 residual stream

    # --- LayerNorm 1 + fused QKV projection (bf16 in, f32 accumulate) --- #
    h = _layernorm(x, ln1_g[0], ln1_b[0]).astype(cdt)
    qkv = jnp.dot(h, qkv_w[0], preferred_element_type=jnp.float32) + qkv_b[0]
    q = (qkv[:, 0 * D:1 * D] * inv_scale).astype(cdt)    # pre-scaled q
    k = qkv[:, 1 * D:2 * D].astype(cdt)
    v = qkv[:, 2 * D:3 * D].astype(cdt)

    # --- head+batch batched self attention: batch dim = Bt*H --- #
    def split_heads(t):                                  # (N, D) -> (Bt*H, S, Hd)
        return jnp.stack(
            [t[b * S:(b + 1) * S, hh * Hd:(hh + 1) * Hd]
             for b in range(Bt) for hh in range(H)], axis=0)

    qh, kh, vh = split_heads(q), split_heads(k), split_heads(v)

    s = jnp.einsum("bqd,bkd->bqk", qh, kh,
                   preferred_element_type=jnp.float32)   # (Bt*H, S, S)
    s = s - jnp.max(s, axis=-1, keepdims=True)
    e = jnp.exp(s)
    p = (e / jnp.sum(e, axis=-1, keepdims=True)).astype(cdt)   # exact softmax divide
    ctx = jnp.einsum("bqk,bkd->bqd", p, vh,
                     preferred_element_type=jnp.float32)  # (Bt*H, S, Hd)

    # merge heads back to (N, D) with lane/row concats (no transposes)
    rows = [jnp.concatenate([ctx[b * H + hh] for hh in range(H)], axis=-1)
            for b in range(Bt)]
    ctx2 = rows[0] if Bt == 1 else jnp.concatenate(rows, axis=0)

    attn_out = jnp.dot(ctx2.astype(cdt), o_w[0],
                       preferred_element_type=jnp.float32) + o_b[0]
    out1 = attn_out + x                                  # residual 1

    # --- LayerNorm 2 + MLP block --- #
    h2 = _layernorm(out1, ln2_g[0], ln2_b[0]).astype(cdt)
    m = _gelu(jnp.dot(h2, fc1_w[0], preferred_element_type=jnp.float32) + fc1_b[0])
    m = jnp.dot(m.astype(cdt), fc2_w[0],
                preferred_element_type=jnp.float32) + fc2_b[0]
    out2 = m + out1                                      # residual 2

    acc_sc[...] = out2                                   # stays in VMEM for layer l+1

    # --- last layer: fold in the final encoder LayerNorm and emit output --- #
    @pl.when(layer == pl.num_programs(1) - 1)
    def _():
        o_ref[...] = (_layernorm(out2, fin_g[...], fin_b[...])
                      .reshape(Bt, S, D).astype(o_ref.dtype))


# -------------------------------- wrapper ------------------------------------ #

def _pick_batch_block(B, S):
    """Fill the MXU M dimension (~256 rows) but keep >= 2 batch blocks so both
    of v7x's TensorCores get work when possible."""
    target = max(1, (256 + S - 1) // S)
    cands = [bt for bt in range(1, B + 1) if B % bt == 0 and bt <= target]
    if not cands:
        return 1
    two_core = [bt for bt in cands if B // bt >= 2]
    return max(two_core) if two_core else max(cands)


def _vmem_limit_bytes(x, params, bt):
    """Budget from actual double-buffered block sizes + scratch + headroom."""
    _, S, D = x.shape
    per_layer = sum(math.prod(params[k].shape[1:]) * params[k].dtype.itemsize
                    for k in ("ln1_g", "ln1_b", "qkv_w", "qkv_b", "o_w", "o_b",
                              "ln2_g", "ln2_b", "fc1_w", "fc1_b", "fc2_w", "fc2_b"))
    shared = sum(math.prod(params[k].shape) * params[k].dtype.itemsize
                 for k in ("pos", "final_g", "final_b"))
    io_blocks = 2 * bt * S * D * x.dtype.itemsize            # x block + out block
    scratch = bt * S * D * 4                                  # f32 resident activation
    est = 2 * (per_layer + shared + io_blocks) + scratch      # double-buffered pipeline
    est = int(est * 1.5)                                      # headroom for intermediates
    # TODO(synk): on v7x (64 MiB VMEM / TC) cap this nearer ~56 MiB; 96 MiB is v5e/v6e.
    return max(32 << 20, min(est, 96 << 20))


def encoder_forward(x, params, num_heads):
    B, S, D = x.shape
    L = params["qkv_w"].shape[0]
    head_dim = D // num_heads
    inv_scale = 1.0 / float(head_dim ** 0.5)
    Bt = _pick_batch_block(B, S)

    kernel = functools.partial(fused_encoder_kernel, num_heads, head_dim, inv_scale)

    def layer_spec(arr):
        """One layer slice of an (L, ...)-stacked parameter, indexed by l."""
        nd = arr.ndim
        return pl.BlockSpec((1,) + arr.shape[1:],
                            lambda b, l, _nd=nd: (l,) + (0,) * (_nd - 1))

    def shared_spec(arr):
        """A parameter shared across the whole grid (pos embedding, final LN)."""
        nd = arr.ndim
        return pl.BlockSpec(arr.shape, lambda b, l, _nd=nd: (0,) * _nd)

    in_specs = [
        pl.BlockSpec((Bt, S, D), lambda b, l: (b, 0, 0)),    # x (batch block)
        shared_spec(params["pos"]),                          # position embedding
        layer_spec(params["ln1_g"]), layer_spec(params["ln1_b"]),
        layer_spec(params["qkv_w"]), layer_spec(params["qkv_b"]),
        layer_spec(params["o_w"]), layer_spec(params["o_b"]),
        layer_spec(params["ln2_g"]), layer_spec(params["ln2_b"]),
        layer_spec(params["fc1_w"]), layer_spec(params["fc1_b"]),
        layer_spec(params["fc2_w"]), layer_spec(params["fc2_b"]),
        shared_spec(params["final_g"]), shared_spec(params["final_b"]),
    ]

    return pl.pallas_call(
        kernel,
        grid_spec=pltpu.PrefetchScalarGridSpec(
            num_scalar_prefetch=0,
            grid=(B // Bt, L),                               # layer axis LAST (sequential)
            in_specs=in_specs,
            out_specs=pl.BlockSpec((Bt, S, D), lambda b, l: (b, 0, 0)),
            scratch_shapes=[pltpu.VMEM((Bt * S, D), jnp.float32)],  # layer-resident act
        ),
        out_shape=jax.ShapeDtypeStruct((B, S, D), x.dtype),
        compiler_params=pltpu.CompilerParams(
            dimension_semantics=("parallel", "arbitrary"),   # batch blocks across TCs (v7x)
            vmem_limit_bytes=_vmem_limit_bytes(x, params, Bt),
        ),
    )(x, params["pos"],
      params["ln1_g"], params["ln1_b"],
      params["qkv_w"], params["qkv_b"],
      params["o_w"], params["o_b"],
      params["ln2_g"], params["ln2_b"],
      params["fc1_w"], params["fc1_b"],
      params["fc2_w"], params["fc2_b"],
      params["final_g"], params["final_b"])


# ---------------------------- parameter init -------------------------------- #

def init_params(key, num_layers, emb_dim, mlp_dim, seq_len):
    D, M, L = emb_dim, mlp_dim, num_layers
    keys = iter(jax.random.split(key, 12 * L + 3))

    def nrm(shape, scale):
        return scale * jax.random.normal(next(keys), shape, jnp.float32)

    def stack(fn):
        return jnp.stack([fn() for _ in range(L)])

    pos = 0.02 * jax.random.normal(next(keys), (1, seq_len, D), jnp.float32)

    # Matmul weights are stored in bf16 (native MXU input rate, half the DMA
    # bytes); LayerNorm params and biases stay f32.
    bf16 = jnp.bfloat16
    params = dict(
        pos=pos,
        ln1_g=stack(lambda: 1.0 + nrm((1, D), 0.05)),
        ln1_b=stack(lambda: nrm((1, D), 0.02)),
        # fused Q|K|V LinearGeneral weights, each (D, H*Hd) flattened -> (D, 3D)
        qkv_w=stack(lambda: nrm((D, 3 * D), 0.05)).astype(bf16),
        qkv_b=stack(lambda: nrm((1, 3 * D), 0.02)),
        o_w=stack(lambda: nrm((D, D), 0.05)).astype(bf16),  # (H*Hd, D) out-projection
        o_b=stack(lambda: nrm((1, D), 0.02)),
        ln2_g=stack(lambda: 1.0 + nrm((1, D), 0.05)),
        ln2_b=stack(lambda: nrm((1, D), 0.02)),
        fc1_w=stack(lambda: nrm((D, M), 0.05)).astype(bf16),
        fc1_b=stack(lambda: nrm((1, M), 0.02)),
        fc2_w=stack(lambda: nrm((M, D), 0.05)).astype(bf16),
        fc2_b=stack(lambda: nrm((1, D), 0.02)),
        final_g=1.0 + nrm((1, D), 0.05),
        final_b=nrm((1, D), 0.02),
    )
    return params


# ------------------------- pure-JAX reference check ------------------------- #

def reference_forward(x, params, num_heads):
    from jax.scipy.special import erf

    def ln(z, g, b, eps=1e-5):
        mu = z.mean(-1, keepdims=True)
        var = ((z - mu) ** 2).mean(-1, keepdims=True)
        return (z - mu) / jnp.sqrt(var + eps) * g + b

    B, S, D = x.shape
    hd = D // num_heads
    scale = hd ** 0.5
    L = params["qkv_w"].shape[0]

    out = x + params["pos"]
    for l in range(L):
        res = out
        h = ln(out, params["ln1_g"][l], params["ln1_b"][l])
        qkv = h @ params["qkv_w"][l].astype(jnp.float32) + params["qkv_b"][l]
        q = qkv[..., 0 * D:1 * D].reshape(B, S, num_heads, hd).transpose(0, 2, 1, 3)
        k = qkv[..., 1 * D:2 * D].reshape(B, S, num_heads, hd).transpose(0, 2, 1, 3)
        v = qkv[..., 2 * D:3 * D].reshape(B, S, num_heads, hd).transpose(0, 2, 1, 3)
        a = jnp.einsum("bhqd,bhkd->bhqk", q, k) / scale
        a = jax.nn.softmax(a, axis=-1)
        o = jnp.einsum("bhqk,bhkd->bhqd", a, v).transpose(0, 2, 1, 3).reshape(B, S, D)
        o = o @ params["o_w"][l].astype(jnp.float32) + params["o_b"][l]
        out = o + res
        res = out
        h2 = ln(out, params["ln2_g"][l], params["ln2_b"][l])
        m = h2 @ params["fc1_w"][l].astype(jnp.float32) + params["fc1_b"][l]
        m = 0.5 * m * (1.0 + erf(m / jnp.sqrt(2.0)))
        m = m @ params["fc2_w"][l].astype(jnp.float32) + params["fc2_b"][l]
        out = m + res
    return ln(out, params["final_g"], params["final_b"])


# ----------------------------------- main ----------------------------------- #

if __name__ == "__main__":
    B = 2
    num_patches = 15
    S = num_patches + 1   # class token included, matches PositionEmbs
    D = 32                # emb_dim
    M = 64                # mlp_dim
    H = 4                 # num_heads
    L = 2                 # num_layers

    key = jax.random.PRNGKey(0)
    k_x, k_p = jax.random.split(key)
    x = jax.random.normal(k_x, (B, S, D), jnp.float32)
    params = init_params(k_p, L, D, M, S)

    out = jax.block_until_ready(encoder_forward(x, params, H))

    with jax.default_matmul_precision("highest"):
        ref = jax.block_until_ready(reference_forward(x, params, H))

    err = float(jnp.max(jnp.abs(out - ref)))
    # bf16 MXU inputs (f32 accumulation): tolerance loosened vs the all-f32
    # version; a structurally wrong kernel would be off by >= 1e-1.
    assert out.shape == (B, S, D) and err < 2e-2, f"max abs err {err}"

    print("KERNEL_OK")
</pallas_src>

<mosaic_0001>
module attributes {stable_mosaic.version = 11 : i64} {
  func.func @fused_encoder_kernel(%arg0: i32, %arg1: i32, %arg2: memref<1x16x32xf32, #tpu.memory_space<vmem>>, %arg3: memref<1x16x32xf32, #tpu.memory_space<vmem>>, %arg4: memref<1x1x32xf32, #tpu.memory_space<vmem>>, %arg5: memref<1x1x32xf32, #tpu.memory_space<vmem>>, %arg6: memref<1x32x96xbf16, #tpu.memory_space<vmem>>, %arg7: memref<1x1x96xf32, #tpu.memory_space<vmem>>, %arg8: memref<1x32x32xbf16, #tpu.memory_space<vmem>>, %arg9: memref<1x1x32xf32, #tpu.memory_space<vmem>>, %arg10: memref<1x1x32xf32, #tpu.memory_space<vmem>>, %arg11: memref<1x1x32xf32, #tpu.memory_space<vmem>>, %arg12: memref<1x32x64xbf16, #tpu.memory_space<vmem>>, %arg13: memref<1x1x64xf32, #tpu.memory_space<vmem>>, %arg14: memref<1x64x32xbf16, #tpu.memory_space<vmem>>, %arg15: memref<1x1x32xf32, #tpu.memory_space<vmem>>, %arg16: memref<1x32xf32, #tpu.memory_space<vmem>>, %arg17: memref<1x32xf32, #tpu.memory_space<vmem>>, %arg18: memref<1x16x32xf32, #tpu.memory_space<vmem>>, %arg19: memref<16x32xf32, #tpu.memory_space<vmem>>) attributes {dimension_semantics = [#tpu.dimension_semantics<parallel>, #tpu.dimension_semantics<arbitrary>], iteration_bounds = array<i64: 2, 2>, scalar_prefetch = 0 : i64, scratch_operands = 1 : i64, tpu.core_type = #tpu.core_type<tc>, window_params = [{transform_indices = @transform_0, window_bounds = array<i64: 1, 16, 32>}, {pipeline_mode = #tpu.pipeline_mode<synchronous>, transform_indices = @transform_1, window_bounds = array<i64: 1, 16, 32>}, {transform_indices = @transform_2, window_bounds = array<i64: 1, 1, 32>}, {transform_indices = @transform_3, window_bounds = array<i64: 1, 1, 32>}, {transform_indices = @transform_4, window_bounds = array<i64: 1, 32, 96>}, {transform_indices = @transform_5, window_bounds = array<i64: 1, 1, 96>}, {transform_indices = @transform_6, window_bounds = array<i64: 1, 32, 32>}, {transform_indices = @transform_7, window_bounds = array<i64: 1, 1, 32>}, {transform_indices = @transform_8, window_bounds = array<i64: 1, 1, 32>}, {transform_indices = @transform_9, window_bounds = array<i64: 1, 1, 32>}, {transform_indices = @transform_10, window_bounds = array<i64: 1, 32, 64>}, {transform_indices = @transform_11, window_bounds = array<i64: 1, 1, 64>}, {transform_indices = @transform_12, window_bounds = array<i64: 1, 64, 32>}, {transform_indices = @transform_13, window_bounds = array<i64: 1, 1, 32>}, {pipeline_mode = #tpu.pipeline_mode<synchronous>, transform_indices = @transform_14, window_bounds = array<i64: 1, 32>}, {pipeline_mode = #tpu.pipeline_mode<synchronous>, transform_indices = @transform_15, window_bounds = array<i64: 1, 32>}, {transform_indices = @transform_16, window_bounds = array<i64: 1, 16, 32>}]} {
    %c0_i32 = arith.constant 0 : i32
    %0 = arith.cmpi eq, %arg1, %c0_i32 : i32
    %1 = arith.extui %0 : i1 to i32
    %c0_i32_0 = arith.constant 0 : i32
    %2 = arith.cmpi ne, %1, %c0_i32_0 : i32
    scf.if %2 {
      %c0_74 = arith.constant 0 : index
      %c0_75 = arith.constant 0 : index
      %c0_76 = arith.constant 0 : index
      %190 = vector.load %arg2[%c0_74, %c0_75, %c0_76] : memref<1x16x32xf32, #tpu.memory_space<vmem>>, vector<1x16x32xf32>
      %c0_77 = arith.constant 0 : index
      %c0_78 = arith.constant 0 : index
      %c0_79 = arith.constant 0 : index
      %191 = vector.load %arg3[%c0_77, %c0_78, %c0_79] : memref<1x16x32xf32, #tpu.memory_space<vmem>>, vector<1x16x32xf32>
      %192 = arith.addf %190, %191 : vector<1x16x32xf32>
      %193 = vector.shape_cast %192 : vector<1x16x32xf32> to vector<16x32xf32>
      %c0_80 = arith.constant 0 : index
      %c0_81 = arith.constant 0 : index
      %194 = vector.load %arg19[%c0_80, %c0_81] : memref<16x32xf32, #tpu.memory_space<vmem>>, vector<16x32xf32>
      tpu.vector_store %arg19[%c0_80, %c0_81], %193 {strides = array<i32>} : memref<16x32xf32, #tpu.memory_space<vmem>>, vector<16x32xf32>,
    } else {
    }
    %c0 = arith.constant 0 : index
    %c0_1 = arith.constant 0 : index
    %3 = vector.load %arg19[%c0, %c0_1] : memref<16x32xf32, #tpu.memory_space<vmem>>, vector<16x32xf32>
    %c0_2 = arith.constant 0 : index
    %c0_3 = arith.constant 0 : index
    %c0_4 = arith.constant 0 : index
    %4 = vector.load %arg4[%c0_2, %c0_3, %c0_4] : memref<1x1x32xf32, #tpu.memory_space<vmem>>, vector<1x1x32xf32>
    %5 = vector.shape_cast %4 : vector<1x1x32xf32> to vector<1x32xf32>
    %c0_5 = arith.constant 0 : index
    %c0_6 = arith.constant 0 : index
    %c0_7 = arith.constant 0 : index
    %6 = vector.load %arg5[%c0_5, %c0_6, %c0_7] : memref<1x1x32xf32, #tpu.memory_space<vmem>>, vector<1x1x32xf32>
    %7 = vector.shape_cast %6 : vector<1x1x32xf32> to vector<1x32xf32>
    %cst = arith.constant dense<0.000000e+00> : vector<16xf32>
    %8 = vector.multi_reduction <add>, %3, %cst [1] : vector<16x32xf32> to vector<16xf32>
    %9 = vector.shape_cast %8 : vector<16xf32> to vector<16x1xf32>
    %cst_8 = arith.constant 3.200000e+01 : f32
    %10 = vector.broadcast %cst_8 : f32 to vector<16x1xf32>
    %11 = arith.divf %9, %10 : vector<16x1xf32>
    %12 = vector.broadcast %11 : vector<16x1xf32> to vector<16x32xf32>
    %13 = arith.subf %3, %12 : vector<16x32xf32>
    %14 = arith.mulf %13, %13 : vector<16x32xf32>
    %cst_9 = arith.constant dense<0.000000e+00> : vector<16xf32>
    %15 = vector.multi_reduction <add>, %14, %cst_9 [1] : vector<16x32xf32> to vector<16xf32>
    %16 = vector.shape_cast %15 : vector<16xf32> to vector<16x1xf32>
    %cst_10 = arith.constant 3.200000e+01 : f32
    %17 = vector.broadcast %cst_10 : f32 to vector<16x1xf32>
    %18 = arith.divf %16, %17 : vector<16x1xf32>
    %19 = vector.broadcast %11 : vector<16x1xf32> to vector<16x32xf32>
    %20 = arith.subf %3, %19 : vector<16x32xf32>
    %cst_11 = arith.constant 9.99999974E-6 : f32
    %21 = vector.broadcast %cst_11 : f32 to vector<16x1xf32>
    %22 = arith.addf %18, %21 : vector<16x1xf32>
    %23 = math.rsqrt %22 : vector<16x1xf32>
    %24 = vector.broadcast %23 : vector<16x1xf32> to vector<16x32xf32>
    %25 = arith.mulf %20, %24 : vector<16x32xf32>
    %26 = vector.broadcast %5 : vector<1x32xf32> to vector<16x32xf32>
    %27 = arith.mulf %25, %26 : vector<16x32xf32>
    %28 = vector.broadcast %7 : vector<1x32xf32> to vector<16x32xf32>
    %29 = arith.addf %27, %28 : vector<16x32xf32>
    %30 = arith.truncf %29 : vector<16x32xf32> to vector<16x32xbf16>
    %c0_12 = arith.constant 0 : index
    %c0_13 = arith.constant 0 : index
    %c0_14 = arith.constant 0 : index
    %31 = vector.load %arg6[%c0_12, %c0_13, %c0_14] : memref<1x32x96xbf16, #tpu.memory_space<vmem>>, vector<1x32x96xbf16>
    %32 = vector.shape_cast %31 : vector<1x32x96xbf16> to vector<32x96xbf16>
    %cst_15 = arith.constant dense<0.000000e+00> : vector<16x96xf32>
    %33 = tpu.matmul %30, %32, %cst_15 {dimension_numbers = #tpu.dot_dimension_numbers<[1], [0], [0], [1], [0, 0, 1, 1], [], []>} : vector<16x32xbf16>, vector<32x96xbf16>, vector<16x96xf32> -> vector<16x96xf32>
    %c0_16 = arith.constant 0 : index
    %c0_17 = arith.constant 0 : index
    %c0_18 = arith.constant 0 : index
    %34 = vector.load %arg7[%c0_16, %c0_17, %c0_18] : memref<1x1x96xf32, #tpu.memory_space<vmem>>, vector<1x1x96xf32>
    %35 = vector.shape_cast %34 : vector<1x1x96xf32> to vector<1x96xf32>
    %36 = vector.broadcast %35 : vector<1x96xf32> to vector<16x96xf32>
    %37 = arith.addf %33, %36 : vector<16x96xf32>
    %38 = vector.extract_strided_slice %37 {offsets = [0, 0], sizes = [16, 32], strides = [1, 1]} : vector<16x96xf32> to vector<16x32xf32>
    %cst_19 = arith.constant 0.353553385 : f32
    %39 = vector.broadcast %cst_19 : f32 to vector<16x32xf32>
    %40 = arith.mulf %38, %39 : vector<16x32xf32>
    %41 = arith.truncf %40 : vector<16x32xf32> to vector<16x32xbf16>
    %42 = vector.extract_strided_slice %37 {offsets = [0, 32], sizes = [16, 32], strides = [1, 1]} : vector<16x96xf32> to vector<16x32xf32>
    %43 = arith.truncf %42 : vector<16x32xf32> to vector<16x32xbf16>
    %44 = vector.extract_strided_slice %37 {offsets = [0, 64], sizes = [16, 32], strides = [1, 1]} : vector<16x96xf32> to vector<16x32xf32>
    %45 = arith.truncf %44 : vector<16x32xf32> to vector<16x32xbf16>
    %46 = vector.extract_strided_slice %41 {offsets = [0, 0], sizes = [16, 8], strides = [1, 1]} : vector<16x32xbf16> to vector<16x8xbf16>
    %47 = vector.extract_strided_slice %41 {offsets = [0, 8], sizes = [16, 8], strides = [1, 1]} : vector<16x32xbf16> to vector<16x8xbf16>
    %48 = vector.extract_strided_slice %41 {offsets = [0, 16], sizes = [16, 8], strides = [1, 1]} : vector<16x32xbf16> to vector<16x8xbf16>
    %49 = vector.extract_strided_slice %41 {offsets = [0, 24], sizes = [16, 8], strides = [1, 1]} : vector<16x32xbf16> to vector<16x8xbf16>
    %50 = vector.shape_cast %46 : vector<16x8xbf16> to vector<1x16x8xbf16>
    %51 = vector.shape_cast %47 : vector<16x8xbf16> to vector<1x16x8xbf16>
    %52 = vector.shape_cast %48 : vector<16x8xbf16> to vector<1x16x8xbf16>
    %53 = vector.shape_cast %49 : vector<16x8xbf16> to vector<1x16x8xbf16>
    %54 = tpu.concatenate %50, %51, %52, %53 in 0 : vector<1x16x8xbf16>, vector<1x16x8xbf16>, vector<1x16x8xbf16>, vector<1x16x8xbf16> -> vector<4x16x8xbf16>
    %55 = vector.extract_strided_slice %43 {offsets = [0, 0], sizes = [16, 8], strides = [1, 1]} : vector<16x32xbf16> to vector<16x8xbf16>
    %56 = vector.extract_strided_slice %43 {offsets = [0, 8], sizes = [16, 8], strides = [1, 1]} : vector<16x32xbf16> to vector<16x8xbf16>
    %57 = vector.extract_strided_slice %43 {offsets = [0, 16], sizes = [16, 8], strides = [1, 1]} : vector<16x32xbf16> to vector<16x8xbf16>
    %58 = vector.extract_strided_slice %43 {offsets = [0, 24], sizes = [16, 8], strides = [1, 1]} : vector<16x32xbf16> to vector<16x8xbf16>
    %59 = vector.shape_cast %55 : vector<16x8xbf16> to vector<1x16x8xbf16>
    %60 = vector.shape_cast %56 : vector<16x8xbf16> to vector<1x16x8xbf16>
    %61 = vector.shape_cast %57 : vector<16x8xbf16> to vector<1x16x8xbf16>
    %62 = vector.shape_cast %58 : vector<16x8xbf16> to vector<1x16x8xbf16>
    %63 = tpu.concatenate %59, %60, %61, %62 in 0 : vector<1x16x8xbf16>, vector<1x16x8xbf16>, vector<1x16x8xbf16>, vector<1x16x8xbf16> -> vector<4x16x8xbf16>
    %64 = vector.extract_strided_slice %45 {offsets = [0, 0], sizes = [16, 8], strides = [1, 1]} : vector<16x32xbf16> to vector<16x8xbf16>
    %65 = vector.extract_strided_slice %45 {offsets = [0, 8], sizes = [16, 8], strides = [1, 1]} : vector<16x32xbf16> to vector<16x8xbf16>
    %66 = vector.extract_strided_slice %45 {offsets = [0, 16], sizes = [16, 8], strides = [1, 1]} : vector<16x32xbf16> to vector<16x8xbf16>
    %67 = vector.extract_strided_slice %45 {offsets = [0, 24], sizes = [16, 8], strides = [1, 1]} : vector<16x32xbf16> to vector<16x8xbf16>
    %68 = vector.shape_cast %64 : vector<16x8xbf16> to vector<1x16x8xbf16>
    %69 = vector.shape_cast %65 : vector<16x8xbf16> to vector<1x16x8xbf16>
    %70 = vector.shape_cast %66 : vector<16x8xbf16> to vector<1x16x8xbf16>
    %71 = vector.shape_cast %67 : vector<16x8xbf16> to vector<1x16x8xbf16>
    %72 = tpu.concatenate %68, %69, %70, %71 in 0 : vector<1x16x8xbf16>, vector<1x16x8xbf16>, vector<1x16x8xbf16>, vector<1x16x8xbf16> -> vector<4x16x8xbf16>
    "tpu.trace_start"() <{level = 10 : i32, message = "bqd,bkd->bqk"}> : () -> ()
    %cst_20 = arith.constant dense<0.000000e+00> : vector<4x16x16xf32>
    %73 = tpu.matmul %54, %63, %cst_20 {dimension_numbers = #tpu.dot_dimension_numbers<[2], [2], [1], [1], [0, 0, 0, 1, 1, 1], [0], [0]>} : vector<4x16x8xbf16>, vector<4x16x8xbf16>, vector<4x16x16xf32> -> vector<4x16x16xf32>
    "tpu.trace_stop"() : () -> ()
    %cst_21 = arith.constant dense<0xFF800000> : vector<4x16xf32>
    %74 = vector.multi_reduction <maximumf>, %73, %cst_21 [2] : vector<4x16x16xf32> to vector<4x16xf32>
    %75 = vector.shape_cast %74 : vector<4x16xf32> to vector<4x16x1xf32>
    %76 = vector.broadcast %75 : vector<4x16x1xf32> to vector<4x16x16xf32>
    %77 = arith.subf %73, %76 : vector<4x16x16xf32>
    %78 = math.exp %77 : vector<4x16x16xf32>
    %cst_22 = arith.constant dense<0.000000e+00> : vector<4x16xf32>
    %79 = vector.multi_reduction <add>, %78, %cst_22 [2] : vector<4x16x16xf32> to vector<4x16xf32>
    %80 = vector.shape_cast %79 : vector<4x16xf32> to vector<4x16x1xf32>
    %81 = vector.broadcast %80 : vector<4x16x1xf32> to vector<4x16x16xf32>
    %82 = arith.divf %78, %81 : vector<4x16x16xf32>
    %83 = arith.truncf %82 : vector<4x16x16xf32> to vector<4x16x16xbf16>
    "tpu.trace_start"() <{level = 10 : i32, message = "bqk,bkd->bqd"}> : () -> ()
    %cst_23 = arith.constant dense<0.000000e+00> : vector<4x16x8xf32>
    %84 = tpu.matmul %83, %72, %cst_23 {dimension_numbers = #tpu.dot_dimension_numbers<[2], [1], [1], [2], [0, 0, 0, 1, 1, 2], [0], [0]>} : vector<4x16x16xbf16>, vector<4x16x8xbf16>, vector<4x16x8xf32> -> vector<4x16x8xf32>
    "tpu.trace_stop"() : () -> ()
    %85 = vector.extract_strided_slice %84 {offsets = [0, 0, 0], sizes = [1, 16, 8], strides = [1, 1, 1]} : vector<4x16x8xf32> to vector<1x16x8xf32>
    %86 = vector.shape_cast %85 : vector<1x16x8xf32> to vector<16x8xf32>
    %87 = vector.extract_strided_slice %84 {offsets = [1, 0, 0], sizes = [1, 16, 8], strides = [1, 1, 1]} : vector<4x16x8xf32> to vector<1x16x8xf32>
    %88 = vector.shape_cast %87 : vector<1x16x8xf32> to vector<16x8xf32>
    %89 = vector.extract_strided_slice %84 {offsets = [2, 0, 0], sizes = [1, 16, 8], strides = [1, 1, 1]} : vector<4x16x8xf32> to vector<1x16x8xf32>
    %90 = vector.shape_cast %89 : vector<1x16x8xf32> to vector<16x8xf32>
    %91 = vector.extract_strided_slice %84 {offsets = [3, 0, 0], sizes = [1, 16, 8], strides = [1, 1, 1]} : vector<4x16x8xf32> to vector<1x16x8xf32>
    %92 = vector.shape_cast %91 : vector<1x16x8xf32> to vector<16x8xf32>
    %93 = tpu.concatenate %86, %88, %90, %92 in 1 : vector<16x8xf32>, vector<16x8xf32>, vector<16x8xf32>, vector<16x8xf32> -> vector<16x32xf32>
    %94 = arith.truncf %93 : vector<16x32xf32> to vector<16x32xbf16>
    %c0_24 = arith.constant 0 : index
    %c0_25 = arith.constant 0 : index
    %c0_26 = arith.constant 0 : index
    %95 = vector.load %arg8[%c0_24, %c0_25, %c0_26] : memref<1x32x32xbf16, #tpu.memory_space<vmem>>, vector<1x32x32xbf16>
    %96 = vector.shape_cast %95 : vector<1x32x32xbf16> to vector<32x32xbf16>
    %cst_27 = arith.constant dense<0.000000e+00> : vector<16x32xf32>
    %97 = tpu.matmul %94, %96, %cst_27 {dimension_numbers = #tpu.dot_dimension_numbers<[1], [0], [0], [1], [0, 0, 1, 1], [], []>} : vector<16x32xbf16>, vector<32x32xbf16>, vector<16x32xf32> -> vector<16x32xf32>
    %c0_28 = arith.constant 0 : index
    %c0_29 = arith.constant 0 : index
    %c0_30 = arith.constant 0 : index
    %98 = vector.load %arg9[%c0_28, %c0_29, %c0_30] : memref<1x1x32xf32, #tpu.memory_space<vmem>>, vector<1x1x32xf32>
    %99 = vector.shape_cast %98 : vector<1x1x32xf32> to vector<1x32xf32>
    %100 = vector.broadcast %99 : vector<1x32xf32> to vector<16x32xf32>
    %101 = arith.addf %97, %100 : vector<16x32xf32>
    %102 = arith.addf %101, %3 : vector<16x32xf32>
    %c0_31 = arith.constant 0 : index
    %c0_32 = arith.constant 0 : index
    %c0_33 = arith.constant 0 : index
    %103 = vector.load %arg10[%c0_31, %c0_32, %c0_33] : memref<1x1x32xf32, #tpu.memory_space<vmem>>, vector<1x1x32xf32>
    %104 = vector.shape_cast %103 : vector<1x1x32xf32> to vector<1x32xf32>
    %c0_34 = arith.constant 0 : index
    %c0_35 = arith.constant 0 : index
    %c0_36 = arith.constant 0 : index
    %105 = vector.load %arg11[%c0_34, %c0_35, %c0_36] : memref<1x1x32xf32, #tpu.memory_space<vmem>>, vector<1x1x32xf32>
    %106 = vector.shape_cast %105 : vector<1x1x32xf32> to vector<1x32xf32>
    %cst_37 = arith.constant dense<0.000000e+00> : vector<16xf32>
    %107 = vector.multi_reduction <add>, %102, %cst_37 [1] : vector<16x32xf32> to vector<16xf32>
    %108 = vector.shape_cast %107 : vector<16xf32> to vector<16x1xf32>
    %cst_38 = arith.constant 3.200000e+01 : f32
    %109 = vector.broadcast %cst_38 : f32 to vector<16x1xf32>
    %110 = arith.divf %108, %109 : vector<16x1xf32>
    %111 = vector.broadcast %110 : vector<16x1xf32> to vector<16x32xf32>
    %112 = arith.subf %102, %111 : vector<16x32xf32>
    %113 = arith.mulf %112, %112 : vector<16x32xf32>
    %cst_39 = arith.constant dense<0.000000e+00> : vector<16xf32>
    %114 = vector.multi_reduction <add>, %113, %cst_39 [1] : vector<16x32xf32> to vector<16xf32>
    %115 = vector.shape_cast %114 : vector<16xf32> to vector<16x1xf32>
    %cst_40 = arith.constant 3.200000e+01 : f32
    %116 = vector.broadcast %cst_40 : f32 to vector<16x1xf32>
    %117 = arith.divf %115, %116 : vector<16x1xf32>
    %118 = vector.broadcast %110 : vector<16x1xf32> to vector<16x32xf32>
    %119 = arith.subf %102, %118 : vector<16x32xf32>
    %cst_41 = arith.constant 9.99999974E-6 : f32
    %120 = vector.broadcast %cst_41 : f32 to vector<16x1xf32>
    %121 = arith.addf %117, %120 : vector<16x1xf32>
    %122 = math.rsqrt %121 : vector<16x1xf32>
    %123 = vector.broadcast %122 : vector<16x1xf32> to vector<16x32xf32>
    %124 = arith.mulf %119, %123 : vector<16x32xf32>
    %125 = vector.broadcast %104 : vector<1x32xf32> to vector<16x32xf32>
    %126 = arith.mulf %124, %125 : vector<16x32xf32>
    %127 = vector.broadcast %106 : vector<1x32xf32> to vector<16x32xf32>
    %128 = arith.addf %126, %127 : vector<16x32xf32>
    %129 = arith.truncf %128 : vector<16x32xf32> to vector<16x32xbf16>
    %c0_42 = arith.constant 0 : index
    %c0_43 = arith.constant 0 : index
    %c0_44 = arith.constant 0 : index
    %130 = vector.load %arg12[%c0_42, %c0_43, %c0_44] : memref<1x32x64xbf16, #tpu.memory_space<vmem>>, vector<1x32x64xbf16>
    %131 = vector.shape_cast %130 : vector<1x32x64xbf16> to vector<32x64xbf16>
    %cst_45 = arith.constant dense<0.000000e+00> : vector<16x64xf32>
    %132 = tpu.matmul %129, %131, %cst_45 {dimension_numbers = #tpu.dot_dimension_numbers<[1], [0], [0], [1], [0, 0, 1, 1], [], []>} : vector<16x32xbf16>, vector<32x64xbf16>, vector<16x64xf32> -> vector<16x64xf32>
    %c0_46 = arith.constant 0 : index
    %c0_47 = arith.constant 0 : index
    %c0_48 = arith.constant 0 : index
    %133 = vector.load %arg13[%c0_46, %c0_47, %c0_48] : memref<1x1x64xf32, #tpu.memory_space<vmem>>, vector<1x1x64xf32>
    %134 = vector.shape_cast %133 : vector<1x1x64xf32> to vector<1x64xf32>
    %135 = vector.broadcast %134 : vector<1x64xf32> to vector<16x64xf32>
    %136 = arith.addf %132, %135 : vector<16x64xf32>
    %cst_49 = arith.constant 5.000000e-01 : f32
    %137 = vector.broadcast %cst_49 : f32 to vector<16x64xf32>
    %138 = arith.mulf %137, %136 : vector<16x64xf32>
    %cst_50 = arith.constant 0.707106769 : f32
    %139 = vector.broadcast %cst_50 : f32 to vector<16x64xf32>
    %140 = arith.mulf %136, %139 : vector<16x64xf32>
    %cst_51 = arith.constant 0.000000e+00 : f32
    %141 = vector.broadcast %cst_51 : f32 to vector<16x64xf32>
    %142 = arith.cmpf oge, %140, %141 : vector<16x64xf32>
    %cst_52 = arith.constant 1.000000e+00 : f32
    %cst_53 = arith.constant -1.000000e+00 : f32
    %143 = vector.broadcast %cst_52 : f32 to vector<16x64xf32>
    %144 = vector.broadcast %cst_53 : f32 to vector<16x64xf32>
    %145 = arith.select %142, %143, %144 : vector<16x64xi1>, vector<16x64xf32>
    %146 = math.absf %140 : vector<16x64xf32>
    %cst_54 = arith.constant 0.327591091 : f32
    %147 = vector.broadcast %cst_54 : f32 to vector<16x64xf32>
    %148 = arith.mulf %147, %146 : vector<16x64xf32>
    %cst_55 = arith.constant 1.000000e+00 : f32
    %149 = vector.broadcast %cst_55 : f32 to vector<16x64xf32>
    %150 = arith.addf %149, %148 : vector<16x64xf32>
    %151 = tpu.reciprocal %150 {approx = true} : vector<16x64xf32> -> vector<16x64xf32>
    %cst_56 = arith.constant 1.06140542 : f32
    %152 = vector.broadcast %cst_56 : f32 to vector<16x64xf32>
    %153 = arith.mulf %152, %151 : vector<16x64xf32>
    %cst_57 = arith.constant -1.45315206 : f32
    %154 = vector.broadcast %cst_57 : f32 to vector<16x64xf32>
    %155 = arith.addf %153, %154 : vector<16x64xf32>
    %156 = arith.mulf %155, %151 : vector<16x64xf32>
    %cst_58 = arith.constant 1.42141378 : f32
    %157 = vector.broadcast %cst_58 : f32 to vector<16x64xf32>
    %158 = arith.addf %156, %157 : vector<16x64xf32>
    %159 = arith.mulf %158, %151 : vector<16x64xf32>
    %cst_59 = arith.constant -0.284496725 : f32
    %160 = vector.broadcast %cst_59 : f32 to vector<16x64xf32>
    %161 = arith.addf %159, %160 : vector<16x64xf32>
    %162 = arith.mulf %161, %151 : vector<16x64xf32>
    %cst_60 = arith.constant 0.254829586 : f32
    %163 = vector.broadcast %cst_60 : f32 to vector<16x64xf32>
    %164 = arith.addf %162, %163 : vector<16x64xf32>
    %165 = arith.mulf %164, %151 : vector<16x64xf32>
    %cst_61 = arith.constant 0.000000e+00 : f32
    %166 = vector.broadcast %cst_61 : f32 to vector<16x64xf32>
    %167 = arith.subf %166, %146 : vector<16x64xf32>
    %168 = arith.mulf %167, %146 : vector<16x64xf32>
    %169 = math.exp %168 : vector<16x64xf32>
    %170 = arith.mulf %165, %169 : vector<16x64xf32>
    %cst_62 = arith.constant 1.000000e+00 : f32
    %171 = vector.broadcast %cst_62 : f32 to vector<16x64xf32>
    %172 = arith.subf %171, %170 : vector<16x64xf32>
    %173 = arith.mulf %145, %172 : vector<16x64xf32>
    %cst_63 = arith.constant 1.000000e+00 : f32
    %174 = vector.broadcast %cst_63 : f32 to vector<16x64xf32>
    %175 = arith.addf %174, %173 : vector<16x64xf32>
    %176 = arith.mulf %138, %175 : vector<16x64xf32>
    %177 = arith.truncf %176 : vector<16x64xf32> to vector<16x64xbf16>
    %c0_64 = arith.constant 0 : index
    %c0_65 = arith.constant 0 : index
    %c0_66 = arith.constant 0 : index
    %178 = vector.load %arg14[%c0_64, %c0_65, %c0_66] : memref<1x64x32xbf16, #tpu.memory_space<vmem>>, vector<1x64x32xbf16>
    %179 = vector.shape_cast %178 : vector<1x64x32xbf16> to vector<64x32xbf16>
    %cst_67 = arith.constant dense<0.000000e+00> : vector<16x32xf32>
    %180 = tpu.matmul %177, %179, %cst_67 {dimension_numbers = #tpu.dot_dimension_numbers<[1], [0], [0], [1], [0, 0, 1, 1], [], []>} : vector<16x64xbf16>, vector<64x32xbf16>, vector<16x32xf32> -> vector<16x32xf32>
    %c0_68 = arith.constant 0 : index
    %c0_69 = arith.constant 0 : index
    %c0_70 = arith.constant 0 : index
    %181 = vector.load %arg15[%c0_68, %c0_69, %c0_70] : memref<1x1x32xf32, #tpu.memory_space<vmem>>, vector<1x1x32xf32>
    %182 = vector.shape_cast %181 : vector<1x1x32xf32> to vector<1x32xf32>
    %183 = vector.broadcast %182 : vector<1x32xf32> to vector<16x32xf32>
    %184 = arith.addf %180, %183 : vector<16x32xf32>
    %185 = arith.addf %184, %102 : vector<16x32xf32>
    %c0_71 = arith.constant 0 : index
    %c0_72 = arith.constant 0 : index
    %186 = vector.load %arg19[%c0_71, %c0_72] : memref<16x32xf32, #tpu.memory_space<vmem>>, vector<16x32xf32>
    tpu.vector_store %arg19[%c0_71, %c0_72], %185 {strides = array<i32>} : memref<16x32xf32, #tpu.memory_space<vmem>>, vector<16x32xf32>,
    %c1_i32 = arith.constant 1 : i32
    %187 = arith.cmpi eq, %arg1, %c1_i32 : i32
    %188 = arith.extui %187 : i1 to i32
    %c0_i32_73 = arith.constant 0 : i32
    %189 = arith.cmpi ne, %188, %c0_i32_73 : i32
    scf.if %189 {
      %c0_74 = arith.constant 0 : index
      %c0_75 = arith.constant 0 : index
      %190 = vector.load %arg16[%c0_74, %c0_75] : memref<1x32xf32, #tpu.memory_space<vmem>>, vector<1x32xf32>
      %c0_76 = arith.constant 0 : index
      %c0_77 = arith.constant 0 : index
      %191 = vector.load %arg17[%c0_76, %c0_77] : memref<1x32xf32, #tpu.memory_space<vmem>>, vector<1x32xf32>
      %cst_78 = arith.constant dense<0.000000e+00> : vector<16xf32>
      %192 = vector.multi_reduction <add>, %185, %cst_78 [1] : vector<16x32xf32> to vector<16xf32>
      %193 = vector.shape_cast %192 : vector<16xf32> to vector<16x1xf32>
      %cst_79 = arith.constant 3.200000e+01 : f32
      %194 = vector.broadcast %cst_79 : f32 to vector<16x1xf32>
      %195 = arith.divf %193, %194 : vector<16x1xf32>
      %196 = vector.broadcast %195 : vector<16x1xf32> to vector<16x32xf32>
      %197 = arith.subf %185, %196 : vector<16x32xf32>
      %198 = arith.mulf %197, %197 : vector<16x32xf32>
      %cst_80 = arith.constant dense<0.000000e+00> : vector<16xf32>
      %199 = vector.multi_reduction <add>, %198, %cst_80 [1] : vector<16x32xf32> to vector<16xf32>
      %200 = vector.shape_cast %199 : vector<16xf32> to vector<16x1xf32>
      %cst_81 = arith.constant 3.200000e+01 : f32
      %201 = vector.broadcast %cst_81 : f32 to vector<16x1xf32>
      %202 = arith.divf %200, %201 : vector<16x1xf32>
      %203 = vector.broadcast %195 : vector<16x1xf32> to vector<16x32xf32>
      %204 = arith.subf %185, %203 : vector<16x32xf32>
      %cst_82 = arith.constant 9.99999974E-6 : f32
      %205 = vector.broadcast %cst_82 : f32 to vector<16x1xf32>
      %206 = arith.addf %202, %205 : vector<16x1xf32>
      %207 = math.rsqrt %206 : vector<16x1xf32>
      %208 = vector.broadcast %207 : vector<16x1xf32> to vector<16x32xf32>
      %209 = arith.mulf %204, %208 : vector<16x32xf32>
      %210 = vector.broadcast %190 : vector<1x32xf32> to vector<16x32xf32>
      %211 = arith.mulf %209, %210 : vector<16x32xf32>
      %212 = vector.broadcast %191 : vector<1x32xf32> to vector<16x32xf32>
      %213 = arith.addf %211, %212 : vector<16x32xf32>
      %214 = vector.shape_cast %213 : vector<16x32xf32> to vector<1x16x32xf32>
      %c0_83 = arith.constant 0 : index
      %c0_84 = arith.constant 0 : index
      %c0_85 = arith.constant 0 : index
      %215 = vector.load %arg18[%c0_83, %c0_84, %c0_85] : memref<1x16x32xf32, #tpu.memory_space<vmem>>, vector<1x16x32xf32>
      tpu.vector_store %arg18[%c0_83, %c0_84, %c0_85], %214 {strides = array<i32>} : memref<1x16x32xf32, #tpu.memory_space<vmem>>, vector<1x16x32xf32>,
    } else {
    }
    return
  }
  func.func @transform_0(%arg0: i32, %arg1: i32) -> (i32, i32, i32) {
    %c0_i32 = arith.constant 0 : i32
    %c0_i32_0 = arith.constant 0 : i32
    %c0_i32_1 = arith.constant 0 : i32
    return %arg0, %c0_i32, %c0_i32_0 : i32, i32, i32
  }
  func.func @transform_1(%arg0: i32, %arg1: i32) -> (i32, i32, i32) {
    %c0_i32 = arith.constant 0 : i32
    %c0_i32_0 = arith.constant 0 : i32
    %c0_i32_1 = arith.constant 0 : i32
    %c0_i32_2 = arith.constant 0 : i32
    return %c0_i32, %c0_i32_0, %c0_i32_1 : i32, i32, i32
  }
  func.func @transform_2(%arg0: i32, %arg1: i32) -> (i32, i32, i32) {
    %c0_i32 = arith.constant 0 : i32
    %c0_i32_0 = arith.constant 0 : i32
    %c0_i32_1 = arith.constant 0 : i32
    return %arg1, %c0_i32, %c0_i32_0 : i32, i32, i32
  }
  func.func @transform_3(%arg0: i32, %arg1: i32) -> (i32, i32, i32) {
    %c0_i32 = arith.constant 0 : i32
    %c0_i32_0 = arith.constant 0 : i32
    %c0_i32_1 = arith.constant 0 : i32
    return %arg1, %c0_i32, %c0_i32_0 : i32, i32, i32
  }
  func.func @transform_4(%arg0: i32, %arg1: i32) -> (i32, i32, i32) {
    %c0_i32 = arith.constant 0 : i32
    %c0_i32_0 = arith.constant 0 : i32
    %c0_i32_1 = arith.constant 0 : i32
    return %arg1, %c0_i32, %c0_i32_0 : i32, i32, i32
  }
  func.func @transform_5(%arg0: i32, %arg1: i32) -> (i32, i32, i32) {
    %c0_i32 = arith.constant 0 : i32
    %c0_i32_0 = arith.constant 0 : i32
    %c0_i32_1 = arith.constant 0 : i32
    return %arg1, %c0_i32, %c0_i32_0 : i32, i32, i32
  }
  func.func @transform_6(%arg0: i32, %arg1: i32) -> (i32, i32, i32) {
    %c0_i32 = arith.constant 0 : i32
    %c0_i32_0 = arith.constant 0 : i32
    %c0_i32_1 = arith.constant 0 : i32
    return %arg1, %c0_i32, %c0_i32_0 : i32, i32, i32
  }
  func.func @transform_7(%arg0: i32, %arg1: i32) -> (i32, i32, i32) {
    %c0_i32 = arith.constant 0 : i32
    %c0_i32_0 = arith.constant 0 : i32
    %c0_i32_1 = arith.constant 0 : i32
    return %arg1, %c0_i32, %c0_i32_0 : i32, i32, i32
  }
  func.func @transform_8(%arg0: i32, %arg1: i32) -> (i32, i32, i32) {
    %c0_i32 = arith.constant 0 : i32
    %c0_i32_0 = arith.constant 0 : i32
    %c0_i32_1 = arith.constant 0 : i32
    return %arg1, %c0_i32, %c0_i32_0 : i32, i32, i32
  }
  func.func @transform_9(%arg0: i32, %arg1: i32) -> (i32, i32, i32) {
    %c0_i32 = arith.constant 0 : i32
    %c0_i32_0 = arith.constant 0 : i32
    %c0_i32_1 = arith.constant 0 : i32
    return %arg1, %c0_i32, %c0_i32_0 : i32, i32, i32
  }
  func.func @transform_10(%arg0: i32, %arg1: i32) -> (i32, i32, i32) {
    %c0_i32 = arith.constant 0 : i32
    %c0_i32_0 = arith.constant 0 : i32
    %c0_i32_1 = arith.constant 0 : i32
    return %arg1, %c0_i32, %c0_i32_0 : i32, i32, i32
  }
  func.func @transform_11(%arg0: i32, %arg1: i32) -> (i32, i32, i32) {
    %c0_i32 = arith.constant 0 : i32
    %c0_i32_0 = arith.constant 0 : i32
    %c0_i32_1 = arith.constant 0 : i32
    return %arg1, %c0_i32, %c0_i32_0 : i32, i32, i32
  }
  func.func @transform_12(%arg0: i32, %arg1: i32) -> (i32, i32, i32) {
    %c0_i32 = arith.constant 0 : i32
    %c0_i32_0 = arith.constant 0 : i32
    %c0_i32_1 = arith.constant 0 : i32
    return %arg1, %c0_i32, %c0_i32_0 : i32, i32, i32
  }
  func.func @transform_13(%arg0: i32, %arg1: i32) -> (i32, i32, i32) {
    %c0_i32 = arith.constant 0 : i32
    %c0_i32_0 = arith.constant 0 : i32
    %c0_i32_1 = arith.constant 0 : i32
    return %arg1, %c0_i32, %c0_i32_0 : i32, i32, i32
  }
  func.func @transform_14(%arg0: i32, %arg1: i32) -> (i32, i32) {
    %c0_i32 = arith.constant 0 : i32
    %c0_i32_0 = arith.constant 0 : i32
    %c0_i32_1 = arith.constant 0 : i32
    return %c0_i32, %c0_i32_0 : i32, i32
  }
  func.func @transform_15(%arg0: i32, %arg1: i32) -> (i32, i32) {
    %c0_i32 = arith.constant 0 : i32
    %c0_i32_0 = arith.constant 0 : i32
    %c0_i32_1 = arith.constant 0 : i32
    return %c0_i32, %c0_i32_0 : i32, i32
  }
  func.func @transform_16(%arg0: i32, %arg1: i32) -> (i32, i32, i32) {
    %c0_i32 = arith.constant 0 : i32
    %c0_i32_0 = arith.constant 0 : i32
    %c0_i32_1 = arith.constant 0 : i32
    return %arg0, %c0_i32, %c0_i32_0 : i32, i32, i32
  }
}

</mosaic_0001>

<llo_original>
// kernel: tpu_custom_call.1
$region0: #{tpu_custom_call.1}
  #allocation0 [shape = 'u32[]', space=smem, size = 0x4, offset = 0x4, fixed_abs, tag = 'smem constant byte address 0x4 - core index']
  #allocation1 [shape = 'u32[144,128]{1,0:T(1,128)}', space=vmem, size = 0x12000, scoped, tag = 'internal scratch']
  #allocation2 [shape = 'f32[16,32]{1,0:T(8,128)}', space=vmem, size = 0x2000, scoped, tag = 'scratch operand']
  %s0 = inlined_call_operand.vmem [shape: f32[2,16,32], index: 0, kind: input, shape index: {}]
  %s1 = inlined_call_operand.hbm [shape: f32[1,16,32], index: 1, kind: input, shape index: {}]
  %s2 = inlined_call_operand.vmem [shape: f32[2,1,32], index: 2, kind: input, shape index: {}]
  %s3 = inlined_call_operand.vmem [shape: f32[2,1,32], index: 3, kind: input, shape index: {}]
  %s4 = inlined_call_operand.vmem [shape: bf16[2,32,96], index: 4, kind: input, shape index: {}]
  %s5 = inlined_call_operand.vmem [shape: f32[2,1,96], index: 5, kind: input, shape index: {}]
  %s6 = inlined_call_operand.vmem [shape: bf16[2,32,32], index: 6, kind: input, shape index: {}]
  %s7 = inlined_call_operand.vmem [shape: f32[2,1,32], index: 7, kind: input, shape index: {}]
  %s8 = inlined_call_operand.vmem [shape: f32[2,1,32], index: 8, kind: input, shape index: {}]
  %s9 = inlined_call_operand.vmem [shape: f32[2,1,32], index: 9, kind: input, shape index: {}]
  %s10 = inlined_call_operand.hbm [shape: bf16[2,32,64], index: 10, kind: input, shape index: {}]
  %s11 = inlined_call_operand.hbm [shape: f32[2,1,64], index: 11, kind: input, shape index: {}]
  %s12 = inlined_call_operand.vmem [shape: bf16[2,64,32], index: 12, kind: input, shape index: {}]
  %s13 = inlined_call_operand.vmem [shape: f32[2,1,32], index: 13, kind: input, shape index: {}]
  %s14 = inlined_call_operand.vmem [shape: f32[1,32], index: 14, kind: input, shape index: {}]
  %s15 = inlined_call_operand.vmem [shape: f32[1,32], index: 15, kind: input, shape index: {}]
  %s16 = inlined_call_operand.hbm [shape: f32[2,16,32], index: 16, kind: output, shape index: {}]
  %s17 = sld [smem:[#allocation0]]
  $region117: #{tpu_custom_call.1} parent=0
    _
  %s19 = ssub.s32 1, %s17
  %s20 = scalar_select 0, %s19, %s17
  $region1: #{tpu_custom_call.1} parent=0
    #allocation3 [shape = 'u8[8192]{0}', space=vmem, size = 0x2000, scoped, tag = 'input window, operand 1, single buffered']
    #allocation4 [shape = 's32[2]{0}', space=sflag, size = 0x8, scoped, tag = 'scoped memory for tpu_custom_call.1']
    #allocation5 [shape = 's32[2]{0}', space=sflag, size = 0x8, scoped, tag = 'scoped memory for tpu_custom_call.1']
    #allocation6 [shape = 'u8[16384]{0}', space=vmem, size = 0x4000, scoped, tag = 'input window, operand 10']
    #allocation7 [shape = 's32[2]{0}', space=sflag, size = 0x8, scoped, tag = 'scoped memory for tpu_custom_call.1']
    #allocation8 [shape = 'u8[1024]{0}', space=vmem, size = 0x400, scoped, tag = 'input window, operand 11']
    #allocation9 [shape = 'u8[16384]{0}', space=vmem, size = 0x4000, scoped, tag = 'output window, operand 0']
    %21 = vsyncpa [#allocation4], 0
    %22 = vsyncpa [#allocation7], 0
    %s23 = scalar_lea.sflag [#allocation7], 1
    %24 = vsyncpa %s23, 0
    %25 = vsyncpa [#allocation5], 0
    %s26 = scalar_lea.sflag [#allocation5], 1
    %27 = vsyncpa %s26, 0
    loop: start=0, step=1, limit=6
    $region2: #{tpu_custom_call.1} parent=1 // loop_pre_header
      _
    $region3: #{tpu_custom_call.1} parent=1 // loop_header
      %s29 = sphi 0, %s33
      %p30 = scmp.ge.s32.totalorder %s29, 6
      %s36 = sphi 0, %s48
      %s37 = sphi 0, %s44
      %s38 = sphi 0, %s36
      %s39 = sphi 0, %s37
      %s40 = sphi 0, %s38
      %s41 = sphi 0, %s39
      %s51 = sphi 0, %s53
      %s54 = sphi 0, %s51
      %s55 = sphi 0, %s54
      %s71 = sphi 0, %s55
      %s75 = sphi 0, %s75
      %s77 = sphi 0, %s75
      %s78 = sphi 0, %s77
      %s92 = sphi 0, %s78
      %s98 = sphi 0, %s100
      %s101 = sphi 0, %s98
      %s102 = sphi 0, %s101
      %s118 = sphi 0, %s102
      %s124 = sphi 0, %s126
      %s127 = sphi 0, %s124
      %s128 = sphi 0, %s127
      %s144 = sphi 0, %s128
      %s150 = sphi 0, %s152
      %s153 = sphi 0, %s150
      %s154 = sphi 0, %s153
      %s170 = sphi 0, %s154
      %s176 = sphi 0, %s178
      %s179 = sphi 0, %s176
      %s180 = sphi 0, %s179
      %s196 = sphi 0, %s180
      %s202 = sphi 0, %s204
      %s205 = sphi 0, %s202
      %s206 = sphi 0, %s205
      %s222 = sphi 0, %s206
      %s228 = sphi 0, %s230
      %s231 = sphi 0, %s228
      %s232 = sphi 0, %s231
      %s248 = sphi 0, %s232
      %s254 = sphi 0, %s256
      %s257 = sphi 0, %s254
      %s258 = sphi 0, %s257
      %s274 = sphi 0, %s258
      %s280 = sphi 0, %s282
      %s283 = sphi 0, %s280
      %s284 = sphi 0, %s283
      %s300 = sphi 0, %s284
      %s306 = sphi 0, %s308
      %s309 = sphi 0, %s306
      %s310 = sphi 0, %s309
      %s326 = sphi 0, %s310
      %s332 = sphi 0, %s334
      %s335 = sphi 0, %s332
      %s336 = sphi 0, %s335
      %s352 = sphi 0, %s336
      %s358 = sphi 0, %s360
      %s361 = sphi 0, %s358
      %s362 = sphi 0, %s361
      %s378 = sphi 0, %s362
      %s384 = sphi 0, %s386
      %s387 = sphi 0, %s384
      %s388 = sphi 0, %s387
      %s404 = sphi 0, %s388
      %s408 = sphi 0, %s408
      %s410 = sphi 0, %s408
      %s411 = sphi 0, %s410
      %s425 = sphi 0, %s411
      %s429 = sphi 0, %s429
      %s431 = sphi 0, %s429
      %s432 = sphi 0, %s431
      %s446 = sphi 0, %s432
      %s452 = sphi 0, %s454
      %s455 = sphi 0, %s452
      %s456 = sphi 0, %s455
      %s472 = sphi 0, %s456
    $region4: #{tpu_custom_call.1} parent=1 // loop_header_branch
      %32 = sbr.rel (%p30) target = $region8
    $region5: #{tpu_custom_call.1} parent=1 // loop_body
      %s34 = ssub.s32 %s29, 1
      %s35 = ssub.s32 %s29, 2
      %s42 = sadd.s32 1, %s37
      %p43 = scmp.ge.s32.totalorder %s42, 2
      %s44 = scalar_select %p43, 0, %s42
      %s45 = sadd.s32 1, %s36
      %s46 = scalar_select %p43, %s45, %s36
      %p47 = scmp.ge.s32.totalorder %s46, 2
      %s48 = scalar_select %p47, 0, %s46
      %s49 = ssub.s32 %s36, %s48
      %p50 = scmp.eq.s32.totalorder %s49, 0
      %s52 = sadd.s32 %s51, 1
      %s53 = scalar_select %p50, %s51, %s52
      %p56 = pneg %p50
      %p57 = scmp.eq.s32.totalorder %s29, 3
      %p58 = por %p56, %p57
      %p59 = scmp.ne.s32.totalorder %s51, %s54
      %p60 = scmp.eq.s32.totalorder %s29, 0
      %p61 = por %p59, %p60
      %p62 = scmp.ne.s32.totalorder %s51, %s54
      %p63 = scmp.eq.s32.totalorder %s34, 3
      %p64 = por %p62, %p63
      %p65 = scmp.ne.s32.totalorder %s54, %s55
      %p66 = scmp.eq.s32.totalorder %s34, 0
      %p67 = por %p65, %p66
      %p68 = scmp.ne.s32.totalorder %s54, %s55
      %p69 = scmp.eq.s32.totalorder %s35, 3
      %p70 = por %p68, %p69
      %p72 = scmp.ne.s32.totalorder %s55, %s71
      %p73 = scmp.eq.s32.totalorder %s35, 0
      %p74 = por %p72, %p73
      %s76 = sadd.s32 %s75, 1
      %p79 = scmp.eq.s32.totalorder %s29, 3
      %p80 = scmp.ne.s32.totalorder %s75, %s77
      %p81 = scmp.eq.s32.totalorder %s29, 0
      %p82 = por %p80, %p81
      %p83 = scmp.ne.s32.totalorder %s75, %s77
      %p84 = scmp.eq.s32.totalorder %s34, 3
      %p85 = por %p83, %p84
      %p86 = scmp.ne.s32.totalorder %s77, %s78
      %p87 = scmp.eq.s32.totalorder %s34, 0
      %p88 = por %p86, %p87
      %p89 = scmp.ne.s32.totalorder %s77, %s78
      %p90 = scmp.eq.s32.totalorder %s35, 3
      %p91 = por %p89, %p90
      %p93 = scmp.ne.s32.totalorder %s78, %s92
      %p94 = scmp.eq.s32.totalorder %s35, 0
      %p95 = por %p93, %p94
      %s96 = ssub.s32 %s37, %s44
      %p97 = scmp.eq.s32.totalorder %s96, 0
      %s99 = sadd.s32 %s98, 1
      %s100 = scalar_select %p97, %s98, %s99
      %p103 = pneg %p97
      %p104 = scmp.eq.s32.totalorder %s29, 3
      %p105 = por %p103, %p104
      %p106 = scmp.ne.s32.totalorder %s98, %s101
      %p107 = scmp.eq.s32.totalorder %s29, 0
      %p108 = por %p106, %p107
      %p109 = scmp.ne.s32.totalorder %s98, %s101
      %p110 = scmp.eq.s32.totalorder %s34, 3
      %p111 = por %p109, %p110
      %p112 = scmp.ne.s32.totalorder %s101, %s102
      %p113 = scmp.eq.s32.totalorder %s34, 0
      %p114 = por %p112, %p113
      %p115 = scmp.ne.s32.totalorder %s101, %s102
      %p116 = scmp.eq.s32.totalorder %s35, 3
      %p117 = por %p115, %p116
      %p119 = scmp.ne.s32.totalorder %s102, %s118
      %p120 = scmp.eq.s32.totalorder %s35, 0
      %p121 = por %p119, %p120
      %s122 = ssub.s32 %s37, %s44
      %p123 = scmp.eq.s32.totalorder %s122, 0
      %s125 = sadd.s32 %s124, 1
      %s126 = scalar_select %p123, %s124, %s125
      %p129 = pneg %p123
      %p130 = scmp.eq.s32.totalorder %s29, 3
      %p131 = por %p129, %p130
      %p132 = scmp.ne.s32.totalorder %s124, %s127
      %p133 = scmp.eq.s32.totalorder %s29, 0
      %p134 = por %p132, %p133
      %p135 = scmp.ne.s32.totalorder %s124, %s127
      %p136 = scmp.eq.s32.totalorder %s34, 3
      %p137 = por %p135, %p136
      %p138 = scmp.ne.s32.totalorder %s127, %s128
      %p139 = scmp.eq.s32.totalorder %s34, 0
      %p140 = por %p138, %p139
      %p141 = scmp.ne.s32.totalorder %s127, %s128
      %p142 = scmp.eq.s32.totalorder %s35, 3
      %p143 = por %p141, %p142
      %p145 = scmp.ne.s32.totalorder %s128, %s144
      %p146 = scmp.eq.s32.totalorder %s35, 0
      %p147 = por %p145, %p146
      %s148 = ssub.s32 %s37, %s44
      %p149 = scmp.eq.s32.totalorder %s148, 0
      %s151 = sadd.s32 %s150, 1
      %s152 = scalar_select %p149, %s150, %s151
      %p155 = pneg %p149
      %p156 = scmp.eq.s32.totalorder %s29, 3
      %p157 = por %p155, %p156
      %p158 = scmp.ne.s32.totalorder %s150, %s153
      %p159 = scmp.eq.s32.totalorder %s29, 0
      %p160 = por %p158, %p159
      %p161 = scmp.ne.s32.totalorder %s150, %s153
      %p162 = scmp.eq.s32.totalorder %s34, 3
      %p163 = por %p161, %p162
      %p164 = scmp.ne.s32.totalorder %s153, %s154
      %p165 = scmp.eq.s32.totalorder %s34, 0
      %p166 = por %p164, %p165
      %p167 = scmp.ne.s32.totalorder %s153, %s154
      %p168 = scmp.eq.s32.totalorder %s35, 3
      %p169 = por %p167, %p168
      %p171 = scmp.ne.s32.totalorder %s154, %s170
      %p172 = scmp.eq.s32.totalorder %s35, 0
      %p173 = por %p171, %p172
      %s174 = ssub.s32 %s37, %s44
      %p175 = scmp.eq.s32.totalorder %s174, 0
      %s177 = sadd.s32 %s176, 1
      %s178 = scalar_select %p175, %s176, %s177
      %p181 = pneg %p175
      %p182 = scmp.eq.s32.totalorder %s29, 3
      %p183 = por %p181, %p182
      %p184 = scmp.ne.s32.totalorder %s176, %s179
      %p185 = scmp.eq.s32.totalorder %s29, 0
      %p186 = por %p184, %p185
      %p187 = scmp.ne.s32.totalorder %s176, %s179
      %p188 = scmp.eq.s32.totalorder %s34, 3
      %p189 = por %p187, %p188
      %p190 = scmp.ne.s32.totalorder %s179, %s180
      %p191 = scmp.eq.s32.totalorder %s34, 0
      %p192 = por %p190, %p191
      %p193 = scmp.ne.s32.totalorder %s179, %s180
      %p194 = scmp.eq.s32.totalorder %s35, 3
      %p195 = por %p193, %p194
      %p197 = scmp.ne.s32.totalorder %s180, %s196
      %p198 = scmp.eq.s32.totalorder %s35, 0
      %p199 = por %p197, %p198
      %s200 = ssub.s32 %s37, %s44
      %p201 = scmp.eq.s32.totalorder %s200, 0
      %s203 = sadd.s32 %s202, 1
      %s204 = scalar_select %p201, %s202, %s203
      %p207 = pneg %p201
      %p208 = scmp.eq.s32.totalorder %s29, 3
      %p209 = por %p207, %p208
      %p210 = scmp.ne.s32.totalorder %s202, %s205
      %p211 = scmp.eq.s32.totalorder %s29, 0
      %p212 = por %p210, %p211
      %p213 = scmp.ne.s32.totalorder %s202, %s205
      %p214 = scmp.eq.s32.totalorder %s34, 3
      %p215 = por %p213, %p214
      %p216 = scmp.ne.s32.totalorder %s205, %s206
      %p217 = scmp.eq.s32.totalorder %s34, 0
      %p218 = por %p216, %p217
      %p219 = scmp.ne.s32.totalorder %s205, %s206
      %p220 = scmp.eq.s32.totalorder %s35, 3
      %p221 = por %p219, %p220
      %p223 = scmp.ne.s32.totalorder %s206, %s222
      %p224 = scmp.eq.s32.totalorder %s35, 0
      %p225 = por %p223, %p224
      %s226 = ssub.s32 %s37, %s44
      %p227 = scmp.eq.s32.totalorder %s226, 0
      %s229 = sadd.s32 %s228, 1
      %s230 = scalar_select %p227, %s228, %s229
      %p233 = pneg %p227
      %p234 = scmp.eq.s32.totalorder %s29, 3
      %p235 = por %p233, %p234
      %p236 = scmp.ne.s32.totalorder %s228, %s231
      %p237 = scmp.eq.s32.totalorder %s29, 0
      %p238 = por %p236, %p237
      %p239 = scmp.ne.s32.totalorder %s228, %s231
      %p240 = scmp.eq.s32.totalorder %s34, 3
      %p241 = por %p239, %p240
      %p242 = scmp.ne.s32.totalorder %s231, %s232
      %p243 = scmp.eq.s32.totalorder %s34, 0
      %p244 = por %p242, %p243
      %p245 = scmp.ne.s32.totalorder %s231, %s232
      %p246 = scmp.eq.s32.totalorder %s35, 3
      %p247 = por %p245, %p246
      %p249 = scmp.ne.s32.totalorder %s232, %s248
      %p250 = scmp.eq.s32.totalorder %s35, 0
      %p251 = por %p249, %p250
      %s252 = ssub.s32 %s37, %s44
      %p253 = scmp.eq.s32.totalorder %s252, 0
      %s255 = sadd.s32 %s254, 1
      %s256 = scalar_select %p253, %s254, %s255
      %p259 = pneg %p253
      %p260 = scmp.eq.s32.totalorder %s29, 3
      %p261 = por %p259, %p260
      %p262 = scmp.ne.s32.totalorder %s254, %s257
      %p263 = scmp.eq.s32.totalorder %s29, 0
      %p264 = por %p262, %p263
      %p265 = scmp.ne.s32.totalorder %s254, %s257
      %p266 = scmp.eq.s32.totalorder %s34, 3
      %p267 = por %p265, %p266
      %p268 = scmp.ne.s32.totalorder %s257, %s258
      %p269 = scmp.eq.s32.totalorder %s34, 0
      %p270 = por %p268, %p269
      %p271 = scmp.ne.s32.totalorder %s257, %s258
      %p272 = scmp.eq.s32.totalorder %s35, 3
      %p273 = por %p271, %p272
      %p275 = scmp.ne.s32.totalorder %s258, %s274
      %p276 = scmp.eq.s32.totalorder %s35, 0
      %p277 = por %p275, %p276
      %s278 = ssub.s32 %s37, %s44
      %p279 = scmp.eq.s32.totalorder %s278, 0
      %s281 = sadd.s32 %s280, 1
      %s282 = scalar_select %p279, %s280, %s281
      %p285 = pneg %p279
      %p286 = scmp.eq.s32.totalorder %s29, 3
      %p287 = por %p285, %p286
      %p288 = scmp.ne.s32.totalorder %s280, %s283
      %p289 = scmp.eq.s32.totalorder %s29, 0
      %p290 = por %p288, %p289
      %p291 = scmp.ne.s32.totalorder %s280, %s283
      %p292 = scmp.eq.s32.totalorder %s34, 3
      %p293 = por %p291, %p292
      %p294 = scmp.ne.s32.totalorder %s283, %s284
      %p295 = scmp.eq.s32.totalorder %s34, 0
      %p296 = por %p294, %p295
      %p297 = scmp.ne.s32.totalorder %s283, %s284
      %p298 = scmp.eq.s32.totalorder %s35, 3
      %p299 = por %p297, %p298
      %p301 = scmp.ne.s32.totalorder %s284, %s300
      %p302 = scmp.eq.s32.totalorder %s35, 0
      %p303 = por %p301, %p302
      %s304 = ssub.s32 %s37, %s44
      %p305 = scmp.eq.s32.totalorder %s304, 0
      %s307 = sadd.s32 %s306, 1
      %s308 = scalar_select %p305, %s306, %s307
      %p311 = pneg %p305
      %p312 = scmp.eq.s32.totalorder %s29, 3
      %p313 = por %p311, %p312
      %p314 = scmp.ne.s32.totalorder %s306, %s309
      %p315 = scmp.eq.s32.totalorder %s29, 0
      %p316 = por %p314, %p315
      %p317 = scmp.ne.s32.totalorder %s306, %s309
      %p318 = scmp.eq.s32.totalorder %s34, 3
      %p319 = por %p317, %p318
      %p320 = scmp.ne.s32.totalorder %s309, %s310
      %p321 = scmp.eq.s32.totalorder %s34, 0
      %p322 = por %p320, %p321
      %p323 = scmp.ne.s32.totalorder %s309, %s310
      %p324 = scmp.eq.s32.totalorder %s35, 3
      %p325 = por %p323, %p324
      %p327 = scmp.ne.s32.totalorder %s310, %s326
      %p328 = scmp.eq.s32.totalorder %s35, 0
      %p329 = por %p327, %p328
      %s330 = ssub.s32 %s37, %s44
      %p331 = scmp.eq.s32.totalorder %s330, 0
      %s333 = sadd.s32 %s332, 1
      %s334 = scalar_select %p331, %s332, %s333
      %p337 = pneg %p331
      %p338 = scmp.eq.s32.totalorder %s29, 3
      %p339 = por %p337, %p338
      %p340 = scmp.ne.s32.totalorder %s332, %s335
      %p341 = scmp.eq.s32.totalorder %s29, 0
      %p342 = por %p340, %p341
      %p343 = scmp.ne.s32.totalorder %s332, %s335
      %p344 = scmp.eq.s32.totalorder %s34, 3
      %p345 = por %p343, %p344
      %p346 = scmp.ne.s32.totalorder %s335, %s336
      %p347 = scmp.eq.s32.totalorder %s34, 0
      %p348 = por %p346, %p347
      %p349 = scmp.ne.s32.totalorder %s335, %s336
      %p350 = scmp.eq.s32.totalorder %s35, 3
      %p351 = por %p349, %p350
      %p353 = scmp.ne.s32.totalorder %s336, %s352
      %p354 = scmp.eq.s32.totalorder %s35, 0
      %p355 = por %p353, %p354
      %s356 = ssub.s32 %s37, %s44
      %p357 = scmp.eq.s32.totalorder %s356, 0
      %s359 = sadd.s32 %s358, 1
      %s360 = scalar_select %p357, %s358, %s359
      %p363 = pneg %p357
      %p364 = scmp.eq.s32.totalorder %s29, 3
      %p365 = por %p363, %p364
      %p366 = scmp.ne.s32.totalorder %s358, %s361
      %p367 = scmp.eq.s32.totalorder %s29, 0
      %p368 = por %p366, %p367
      %p369 = scmp.ne.s32.totalorder %s358, %s361
      %p370 = scmp.eq.s32.totalorder %s34, 3
      %p371 = por %p369, %p370
      %p372 = scmp.ne.s32.totalorder %s361, %s362
      %p373 = scmp.eq.s32.totalorder %s34, 0
      %p374 = por %p372, %p373
      %p375 = scmp.ne.s32.totalorder %s361, %s362
      %p376 = scmp.eq.s32.totalorder %s35, 3
      %p377 = por %p375, %p376
      %p379 = scmp.ne.s32.totalorder %s362, %s378
      %p380 = scmp.eq.s32.totalorder %s35, 0
      %p381 = por %p379, %p380
      %s382 = ssub.s32 %s37, %s44
      %p383 = scmp.eq.s32.totalorder %s382, 0
      %s385 = sadd.s32 %s384, 1
      %s386 = scalar_select %p383, %s384, %s385
      %p389 = pneg %p383
      %p390 = scmp.eq.s32.totalorder %s29, 3
      %p391 = por %p389, %p390
      %p392 = scmp.ne.s32.totalorder %s384, %s387
      %p393 = scmp.eq.s32.totalorder %s29, 0
      %p394 = por %p392, %p393
      %p395 = scmp.ne.s32.totalorder %s384, %s387
      %p396 = scmp.eq.s32.totalorder %s34, 3
      %p397 = por %p395, %p396
      %p398 = scmp.ne.s32.totalorder %s387, %s388
      %p399 = scmp.eq.s32.totalorder %s34, 0
      %p400 = por %p398, %p399
      %p401 = scmp.ne.s32.totalorder %s387, %s388
      %p402 = scmp.eq.s32.totalorder %s35, 3
      %p403 = por %p401, %p402
      %p405 = scmp.ne.s32.totalorder %s388, %s404
      %p406 = scmp.eq.s32.totalorder %s35, 0
      %p407 = por %p405, %p406
      %s409 = sadd.s32 %s408, 1
      %p412 = scmp.eq.s32.totalorder %s29, 3
      %p413 = scmp.ne.s32.totalorder %s408, %s410
      %p414 = scmp.eq.s32.totalorder %s29, 0
      %p415 = por %p413, %p414
      %p416 = scmp.ne.s32.totalorder %s408, %s410
      %p417 = scmp.eq.s32.totalorder %s34, 3
      %p418 = por %p416, %p417
      %p419 = scmp.ne.s32.totalorder %s410, %s411
      %p420 = scmp.eq.s32.totalorder %s34, 0
      %p421 = por %p419, %p420
      %p422 = scmp.ne.s32.totalorder %s410, %s411
      %p423 = scmp.eq.s32.totalorder %s35, 3
      %p424 = por %p422, %p423
      %p426 = scmp.ne.s32.totalorder %s411, %s425
      %p427 = scmp.eq.s32.totalorder %s35, 0
      %p428 = por %p426, %p427
      %s430 = sadd.s32 %s429, 1
      %p433 = scmp.eq.s32.totalorder %s29, 3
      %p434 = scmp.ne.s32.totalorder %s429, %s431
      %p435 = scmp.eq.s32.totalorder %s29, 0
      %p436 = por %p434, %p435
      %p437 = scmp.ne.s32.totalorder %s429, %s431
      %p438 = scmp.eq.s32.totalorder %s34, 3
      %p439 = por %p437, %p438
      %p440 = scmp.ne.s32.totalorder %s431, %s432
      %p441 = scmp.eq.s32.totalorder %s34, 0
      %p442 = por %p440, %p441
      %p443 = scmp.ne.s32.totalorder %s431, %s432
      %p444 = scmp.eq.s32.totalorder %s35, 3
      %p445 = por %p443, %p444
      %p447 = scmp.ne.s32.totalorder %s432, %s446
      %p448 = scmp.eq.s32.totalorder %s35, 0
      %p449 = por %p447, %p448
      %s450 = ssub.s32 %s36, %s48
      %p451 = scmp.eq.s32.totalorder %s450, 0
      %s453 = sadd.s32 %s452, 1
      %s454 = scalar_select %p451, %s452, %s453
      %p457 = pneg %p451
      %p458 = scmp.eq.s32.totalorder %s29, 3
      %p459 = por %p457, %p458
      %p460 = scmp.ne.s32.totalorder %s452, %s455
      %p461 = scmp.eq.s32.totalorder %s29, 0
      %p462 = por %p460, %p461
      %p463 = scmp.ne.s32.totalorder %s452, %s455
      %p464 = scmp.eq.s32.totalorder %s34, 3
      %p465 = por %p463, %p464
      %p466 = scmp.ne.s32.totalorder %s455, %s456
      %p467 = scmp.eq.s32.totalorder %s34, 0
      %p468 = por %p466, %p467
      %p469 = scmp.ne.s32.totalorder %s455, %s456
      %p470 = scmp.eq.s32.totalorder %s35, 3
      %p471 = por %p469, %p470
      %p473 = scmp.ne.s32.totalorder %s456, %s472
      %p474 = scmp.eq.s32.totalorder %s35, 0
      %p475 = por %p473, %p474
      %p476 = scmp.le.s32.totalorder 1, %s29
      %p477 = scmp.lt.s32.totalorder %s29, 5
      %p478 = pnand %p476, %p477
      %p479 = pneg %p478
      // Predicated region
      $region9: #{tpu_custom_call.1} parent=5 // pred_check
        _
      $region10: #{tpu_custom_call.1} parent=5 // pred_check_branch
        %481 = sbr.rel (%p478) target = $region12
      $region11: #{tpu_custom_call.1} parent=5 // pred_region
        %s482 = ssub.s32 %s29, 1
        // Predicated region
        $region13: #{tpu_custom_call.1} parent=11 // pred_check
          %p483 = pneg %p88
        $region14: #{tpu_custom_call.1} parent=11 // pred_check_branch
          %485 = sbr.rel (%p483) target = $region16
        $region15: #{tpu_custom_call.1} parent=11 // pred_region
          %s487 = ssub.s32 256, 256
          %488 = vsyncadd [#allocation4], %s487
          %s489 = sshll.u32 [#allocation3], 4
          %s490 = int_to_ptr.vmem [resolvable:$true] %s489
          %495 = dma.hbm_to_vmem [thread:$0]  %s1, 256, %s490, [#allocation4], 128, 128, 8
        $region16: #{tpu_custom_call.1} parent=11 // pred_fallthru
          _
        // Predicated region
        $region17: #{tpu_custom_call.1} parent=11 // pred_check
          %p496 = pneg %p421
        $region18: #{tpu_custom_call.1} parent=11 // pred_check_branch
          %498 = sbr.rel (%p496) target = $region20
        $region19: #{tpu_custom_call.1} parent=11 // pred_region
          _
        $region20: #{tpu_custom_call.1} parent=11 // pred_fallthru
          _
        // Predicated region
        $region21: #{tpu_custom_call.1} parent=11 // pred_check
          %p499 = pneg %p442
        $region22: #{tpu_custom_call.1} parent=11 // pred_check_branch
          %501 = sbr.rel (%p499) target = $region24
        $region23: #{tpu_custom_call.1} parent=11 // pred_region
          _
        $region24: #{tpu_custom_call.1} parent=11 // pred_fallthru
          _
      $region12: #{tpu_custom_call.1} parent=5 // pred_fallthru
        _
      %p502 = scmp.lt.s32.totalorder %s29, 4
      // Predicated region
      $region25: #{tpu_custom_call.1} parent=5 // pred_check
        %p503 = pneg %p502
      $region26: #{tpu_custom_call.1} parent=5 // pred_check_branch
        %505 = sbr.rel (%p503) target = $region28
      $region27: #{tpu_custom_call.1} parent=5 // pred_region
        // Predicated region
        $region29: #{tpu_custom_call.1} parent=27 // pred_check
          %p506 = pneg %p61
        $region30: #{tpu_custom_call.1} parent=27 // pred_check_branch
          %508 = sbr.rel (%p506) target = $region32
        $region31: #{tpu_custom_call.1} parent=27 // pred_region
          %p509 = scmp.lt.s32.totalorder %s36, 1
          %s510 = scalar_select %p509, %s36, 1
          %s511 = smul.addr %s510, 2
          %s512 = smul.addr %s511, 8
          %s513 = scalar_lea.vmem %s0, %s512
        $region32: #{tpu_custom_call.1} parent=27 // pred_fallthru
          _
        // Predicated region
        $region33: #{tpu_custom_call.1} parent=27 // pred_check
          %p514 = pneg %p108
        $region34: #{tpu_custom_call.1} parent=27 // pred_check_branch
          %516 = sbr.rel (%p514) target = $region36
        $region35: #{tpu_custom_call.1} parent=27 // pred_region
          %p517 = scmp.lt.s32.totalorder %s37, 1
          %s518 = scalar_select %p517, %s37, 1
          %s519 = scalar_lea.vmem %s2, %s518
        $region36: #{tpu_custom_call.1} parent=27 // pred_fallthru
          _
        // Predicated region
        $region37: #{tpu_custom_call.1} parent=27 // pred_check
          %p520 = pneg %p134
        $region38: #{tpu_custom_call.1} parent=27 // pred_check_branch
          %522 = sbr.rel (%p520) target = $region40
        $region39: #{tpu_custom_call.1} parent=27 // pred_region
          %p523 = scmp.lt.s32.totalorder %s37, 1
          %s524 = scalar_select %p523, %s37, 1
          %s525 = scalar_lea.vmem %s3, %s524
        $region40: #{tpu_custom_call.1} parent=27 // pred_fallthru
          _
        // Predicated region
        $region41: #{tpu_custom_call.1} parent=27 // pred_check
          %p526 = pneg %p160
        $region42: #{tpu_custom_call.1} parent=27 // pred_check_branch
          %528 = sbr.rel (%p526) target = $region44
        $region43: #{tpu_custom_call.1} parent=27 // pred_region
          %p529 = scmp.lt.s32.totalorder %s37, 1
          %s530 = scalar_select %p529, %s37, 1
          %s531 = smul.addr %s530, 4
          %s532 = smul.addr %s531, 4
          %s533 = scalar_lea.vmem %s4, %s532
        $region44: #{tpu_custom_call.1} parent=27 // pred_fallthru
          _
        // Predicated region
        $region45: #{tpu_custom_call.1} parent=27 // pred_check
          %p534 = pneg %p186
        $region46: #{tpu_custom_call.1} parent=27 // pred_check_branch
          %536 = sbr.rel (%p534) target = $region48
        $region47: #{tpu_custom_call.1} parent=27 // pred_region
          %p537 = scmp.lt.s32.totalorder %s37, 1
          %s538 = scalar_select %p537, %s37, 1
          %s539 = scalar_lea.vmem %s5, %s538
        $region48: #{tpu_custom_call.1} parent=27 // pred_fallthru
          _
        // Predicated region
        $region49: #{tpu_custom_call.1} parent=27 // pred_check
          %p540 = pneg %p212
        $region50: #{tpu_custom_call.1} parent=27 // pred_check_branch
          %542 = sbr.rel (%p540) target = $region52
        $region51: #{tpu_custom_call.1} parent=27 // pred_region
          %p543 = scmp.lt.s32.totalorder %s37, 1
          %s544 = scalar_select %p543, %s37, 1
          %s545 = smul.addr %s544, 4
          %s546 = smul.addr %s545, 4
          %s547 = scalar_lea.vmem %s6, %s546
        $region52: #{tpu_custom_call.1} parent=27 // pred_fallthru
          _
        // Predicated region
        $region53: #{tpu_custom_call.1} parent=27 // pred_check
          %p548 = pneg %p238
        $region54: #{tpu_custom_call.1} parent=27 // pred_check_branch
          %550 = sbr.rel (%p548) target = $region56
        $region55: #{tpu_custom_call.1} parent=27 // pred_region
          %p551 = scmp.lt.s32.totalorder %s37, 1
          %s552 = scalar_select %p551, %s37, 1
          %s553 = scalar_lea.vmem %s7, %s552
        $region56: #{tpu_custom_call.1} parent=27 // pred_fallthru
          _
        // Predicated region
        $region57: #{tpu_custom_call.1} parent=27 // pred_check
          %p554 = pneg %p264
        $region58: #{tpu_custom_call.1} parent=27 // pred_check_branch
          %556 = sbr.rel (%p554) target = $region60
        $region59: #{tpu_custom_call.1} parent=27 // pred_region
          %p557 = scmp.lt.s32.totalorder %s37, 1
          %s558 = scalar_select %p557, %s37, 1
          %s559 = scalar_lea.vmem %s8, %s558
        $region60: #{tpu_custom_call.1} parent=27 // pred_fallthru
          _
        // Predicated region
        $region61: #{tpu_custom_call.1} parent=27 // pred_check
          %p560 = pneg %p290
        $region62: #{tpu_custom_call.1} parent=27 // pred_check_branch
          %562 = sbr.rel (%p560) target = $region64
        $region63: #{tpu_custom_call.1} parent=27 // pred_region
          %p563 = scmp.lt.s32.totalorder %s37, 1
          %s564 = scalar_select %p563, %s37, 1
          %s565 = scalar_lea.vmem %s9, %s564
        $region64: #{tpu_custom_call.1} parent=27 // pred_fallthru
          _
        // Predicated region
        $region65: #{tpu_custom_call.1} parent=27 // pred_check
          %p566 = pneg %p316
        $region66: #{tpu_custom_call.1} parent=27 // pred_check_branch
          %568 = sbr.rel (%p566) target = $region68
        $region67: #{tpu_custom_call.1} parent=27 // pred_region
          %s569 = sand.u32 %s29, 1
          %s570 = scalar_lea.sflag [#allocation7], %s569
          %s571 = sand.u32 %s306, 1
          %s572 = smul.addr %s571, 16
          %s573 = scalar_lea.vmem [#allocation6], %s572
          %s575 = ssub.s32 256, 256
          %576 = vsyncadd %s570, %s575
          %s577 = smul.addr %s37, 4
          %s578 = smul.addr %s577, 64
          %s579 = scalar_lea.hbm %s10, %s578
          %s580 = sshll.u32 %s573, 4
          %s581 = int_to_ptr.vmem [resolvable:$true] %s580
          %586 = dma.hbm_to_vmem [thread:$0]  %s579, 256, %s581, %s570, 64, 64, 4
        $region68: #{tpu_custom_call.1} parent=27 // pred_fallthru
          _
        // Predicated region
        $region69: #{tpu_custom_call.1} parent=27 // pred_check
          %p587 = pneg %p342
        $region70: #{tpu_custom_call.1} parent=27 // pred_check_branch
          %589 = sbr.rel (%p587) target = $region72
        $region71: #{tpu_custom_call.1} parent=27 // pred_region
          %s590 = sand.u32 %s29, 1
          %s591 = scalar_lea.sflag [#allocation7], %s590
          %s592 = sand.u32 %s332, 1
          %s593 = scalar_lea.vmem [#allocation8], %s592
          %s595 = ssub.s32 16, 16
          %596 = vsyncadd %s591, %s595
          %s597 = smul.addr %s37, 16
          %s598 = scalar_lea.hbm %s11, %s597
          %s600 = sshll.u32 %s593, 4
          %s601 = int_to_ptr.vmem [resolvable:$true] %s600
          %603 = dma.hbm_to_vmem [thread:$0]  %s598, 16, %s601, %s591
        $region72: #{tpu_custom_call.1} parent=27 // pred_fallthru
          _
        // Predicated region
        $region73: #{tpu_custom_call.1} parent=27 // pred_check
          %p604 = pneg %p368
        $region74: #{tpu_custom_call.1} parent=27 // pred_check_branch
          %606 = sbr.rel (%p604) target = $region76
        $region75: #{tpu_custom_call.1} parent=27 // pred_region
          %p607 = scmp.lt.s32.totalorder %s37, 1
          %s608 = scalar_select %p607, %s37, 1
          %s609 = smul.addr %s608, 8
          %s610 = smul.addr %s609, 4
          %s611 = scalar_lea.vmem %s12, %s610
        $region76: #{tpu_custom_call.1} parent=27 // pred_fallthru
          _
        // Predicated region
        $region77: #{tpu_custom_call.1} parent=27 // pred_check
          %p612 = pneg %p394
        $region78: #{tpu_custom_call.1} parent=27 // pred_check_branch
          %614 = sbr.rel (%p612) target = $region80
        $region79: #{tpu_custom_call.1} parent=27 // pred_region
          %p615 = scmp.lt.s32.totalorder %s37, 1
          %s616 = scalar_select %p615, %s37, 1
          %s617 = scalar_lea.vmem %s13, %s616
        $region80: #{tpu_custom_call.1} parent=27 // pred_fallthru
          _
      $region28: #{tpu_custom_call.1} parent=5 // pred_fallthru
        _
      %p618 = scmp.le.s32.totalorder 1, %s29
      %p619 = scmp.lt.s32.totalorder %s29, 5
      %p620 = pnand %p618, %p619
      %p621 = pneg %p620
      // Predicated region
      $region81: #{tpu_custom_call.1} parent=5 // pred_check
        _
      $region82: #{tpu_custom_call.1} parent=5 // pred_check_branch
        %623 = sbr.rel (%p620) target = $region84
      $region83: #{tpu_custom_call.1} parent=5 // pred_region
        %s624 = ssub.s32 %s29, 1
        // Predicated region
        $region85: #{tpu_custom_call.1} parent=83 // pred_check
          %p625 = pneg %p88
        $region86: #{tpu_custom_call.1} parent=83 // pred_check_branch
          %627 = sbr.rel (%p625) target = $region88
        $region87: #{tpu_custom_call.1} parent=83 // pred_region
          %628 = dma.done [#allocation4], 256
        $region88: #{tpu_custom_call.1} parent=83 // pred_fallthru
          _
        %s629 = sand.u32 %s34, 1
        %s630 = scalar_lea.sflag [#allocation7], %s629
        %s631 = sand.u32 %s309, 1
        %s632 = smul.addr %s631, 16
        %s633 = scalar_lea.vmem [#allocation6], %s632
        // Predicated region
        $region89: #{tpu_custom_call.1} parent=83 // pred_check
          %p634 = pneg %p322
        $region90: #{tpu_custom_call.1} parent=83 // pred_check_branch
          %636 = sbr.rel (%p634) target = $region92
        $region91: #{tpu_custom_call.1} parent=83 // pred_region
          %637 = dma.done %s630, 256
        $region92: #{tpu_custom_call.1} parent=83 // pred_fallthru
          _
        %s638 = sand.u32 %s34, 1
        %s639 = scalar_lea.sflag [#allocation7], %s638
        %s640 = sand.u32 %s335, 1
        %s641 = scalar_lea.vmem [#allocation8], %s640
        // Predicated region
        $region93: #{tpu_custom_call.1} parent=83 // pred_check
          %p642 = pneg %p348
        $region94: #{tpu_custom_call.1} parent=83 // pred_check_branch
          %644 = sbr.rel (%p642) target = $region96
        $region95: #{tpu_custom_call.1} parent=83 // pred_region
          %645 = dma.done %s639, 16
        $region96: #{tpu_custom_call.1} parent=83 // pred_fallthru
          _
        %p646 = scmp.lt.s32.totalorder %s38, 1
        %s647 = scalar_select %p646, %s38, 1
        %s648 = smul.addr %s647, 2
        %s649 = smul.addr %s648, 8
        %s650 = scalar_lea.vmem %s0, %s649
        %p651 = pneg %p67
        %p652 = pneg %p64
        %p653 = pneg %p88
        %p654 = pneg %p85
        %p655 = scmp.lt.s32.totalorder %s39, 1
        %s656 = scalar_select %p655, %s39, 1
        %s657 = scalar_lea.vmem %s2, %s656
        %p658 = pneg %p114
        %p659 = pneg %p111
        %p660 = scmp.lt.s32.totalorder %s39, 1
        %s661 = scalar_select %p660, %s39, 1
        %s662 = scalar_lea.vmem %s3, %s661
        %p663 = pneg %p140
        %p664 = pneg %p137
        %p665 = scmp.lt.s32.totalorder %s39, 1
        %s666 = scalar_select %p665, %s39, 1
        %s667 = smul.addr %s666, 4
        %s668 = smul.addr %s667, 4
        %s669 = scalar_lea.vmem %s4, %s668
        %p670 = pneg %p166
        %p671 = pneg %p163
        %p672 = scmp.lt.s32.totalorder %s39, 1
        %s673 = scalar_select %p672, %s39, 1
        %s674 = scalar_lea.vmem %s5, %s673
        %p675 = pneg %p192
        %p676 = pneg %p189
        %p677 = scmp.lt.s32.totalorder %s39, 1
        %s678 = scalar_select %p677, %s39, 1
        %s679 = smul.addr %s678, 4
        %s680 = smul.addr %s679, 4
        %s681 = scalar_lea.vmem %s6, %s680
        %p682 = pneg %p218
        %p683 = pneg %p215
        %p684 = scmp.lt.s32.totalorder %s39, 1
        %s685 = scalar_select %p684, %s39, 1
        %s686 = scalar_lea.vmem %s7, %s685
        %p687 = pneg %p244
        %p688 = pneg %p241
        %p689 = scmp.lt.s32.totalorder %s39, 1
        %s690 = scalar_select %p689, %s39, 1
        %s691 = scalar_lea.vmem %s8, %s690
        %p692 = pneg %p270
        %p693 = pneg %p267
        %p694 = scmp.lt.s32.totalorder %s39, 1
        %s695 = scalar_select %p694, %s39, 1
        %s696 = scalar_lea.vmem %s9, %s695
        %p697 = pneg %p296
        %p698 = pneg %p293
        %s699 = sand.u32 %s34, 1
        %s700 = scalar_lea.sflag [#allocation7], %s699
        %s701 = sand.u32 %s309, 1
        %s702 = smul.addr %s701, 16
        %s703 = scalar_lea.vmem [#allocation6], %s702
        %p704 = pneg %p322
        %p705 = pneg %p319
        %s706 = sand.u32 %s34, 1
        %s707 = scalar_lea.sflag [#allocation7], %s706
        %s708 = sand.u32 %s335, 1
        %s709 = scalar_lea.vmem [#allocation8], %s708
        %p710 = pneg %p348
        %p711 = pneg %p345
        %p712 = scmp.lt.s32.totalorder %s39, 1
        %s713 = scalar_select %p712, %s39, 1
        %s714 = smul.addr %s713, 8
        %s715 = smul.addr %s714, 4
        %s716 = scalar_lea.vmem %s12, %s715
        %p717 = pneg %p374
        %p718 = pneg %p371
        %p719 = scmp.lt.s32.totalorder %s39, 1
        %s720 = scalar_select %p719, %s39, 1
        %s721 = scalar_lea.vmem %s13, %s720
        %p722 = pneg %p400
        %p723 = pneg %p397
        %p724 = pneg %p421
        %p725 = pneg %p418
        %p726 = pneg %p442
        %p727 = pneg %p439
        %p728 = pneg %p468
        %p729 = pneg %p465
        %s730 = sand.u32 %s455, 1
        %s731 = scalar_lea.sflag [#allocation5], %s730
        %s732 = sand.u32 %s455, 1
        %s733 = smul.addr %s732, 16
        %s734 = scalar_lea.vmem [#allocation9], %s733
        %p735 = scmp.lt.s32.totalorder %s38, 1
        %s736 = scalar_select %p735, %s38, 1
        %s737 = smul.addr %s736, 2
        %s738 = smul.addr %s737, 8
        %s739 = scalar_lea.vmem %s0, %s738
        %p740 = scmp.lt.s32.totalorder %s39, 1
        %s741 = scalar_select %p740, %s39, 1
        %s742 = scalar_lea.vmem %s2, %s741
        %p743 = scmp.lt.s32.totalorder %s39, 1
        %s744 = scalar_select %p743, %s39, 1
        %s745 = scalar_lea.vmem %s3, %s744
        %p746 = scmp.lt.s32.totalorder %s39, 1
        %s747 = scalar_select %p746, %s39, 1
        %s748 = smul.addr %s747, 4
        %s749 = smul.addr %s748, 4
        %s750 = scalar_lea.vmem %s4, %s749
        %p751 = scmp.lt.s32.totalorder %s39, 1
        %s752 = scalar_select %p751, %s39, 1
        %s753 = scalar_lea.vmem %s5, %s752
        %p754 = scmp.lt.s32.totalorder %s39, 1
        %s755 = scalar_select %p754, %s39, 1
        %s756 = smul.addr %s755, 4
        %s757 = smul.addr %s756, 4
        %s758 = scalar_lea.vmem %s6, %s757
        %p759 = scmp.lt.s32.totalorder %s39, 1
        %s760 = scalar_select %p759, %s39, 1
        %s761 = scalar_lea.vmem %s7, %s760
        %p762 = scmp.lt.s32.totalorder %s39, 1
        %s763 = scalar_select %p762, %s39, 1
        %s764 = scalar_lea.vmem %s8, %s763
        %p765 = scmp.lt.s32.totalorder %s39, 1
        %s766 = scalar_select %p765, %s39, 1
        %s767 = scalar_lea.vmem %s9, %s766
        %p768 = scmp.lt.s32.totalorder %s39, 1
        %s769 = scalar_select %p768, %s39, 1
        %s770 = smul.addr %s769, 8
        %s771 = smul.addr %s770, 4
        %s772 = scalar_lea.vmem %s12, %s771
        %p773 = scmp.lt.s32.totalorder %s39, 1
        %s774 = scalar_select %p773, %s39, 1
        %s775 = scalar_lea.vmem %s13, %s774
        %p777 = scmp.eq.s32.totalorder %s39, 0
        // Predicated region
        $region97: #{tpu_custom_call.1} parent=83 // pred_check
          %p778 = pneg %p777
        $region98: #{tpu_custom_call.1} parent=83 // pred_check_branch
          %780 = sbr.rel (%p778) target = $region100
        $region99: #{tpu_custom_call.1} parent=83 // pred_region
          %v781 = vld [vmem:[%s739] sm:$0xff]
          %v782 = vld [vmem:[%s739 + $0x8] sm:$0xff]
          %v783 = vld [vmem:[#allocation3] sm:$0xff]
          %v784 = vld [vmem:[#allocation3 + $0x8] sm:$0xff]
          %v785 = vadd.f32 %v781, %v783
          %v786 = vadd.f32 %v782, %v784
          %vm787 = vcmask 261120
          %788 = vst.msk [vmem:[#allocation2] sm:$0xff] %vm787, %v785
          %789 = vst.msk [vmem:[#allocation2 + $0x8] sm:$0xff] %vm787, %v786
        $region100: #{tpu_custom_call.1} parent=83 // pred_fallthru
          _
        %v790 = vld [vmem:[#allocation2] sm:$0xff]
        %v791 = vld [vmem:[#allocation2 + $0x8] sm:$0xff]
        %v792 = vld [vmem:[%s742] sm:$0x1]
        %v793 = vld [vmem:[%s745] sm:$0x1]
        %vm794 = vcmask 261120
        %v795 = vsel %vm794, %v790, 0.0
        %796 = vadd.xlane.f32.xlu0 %v795
        %v797 = vpop.xlane.xlu0 %796
        %v798 = vsel %vm794, %v791, 0.0
        %799 = vadd.xlane.f32.xlu0 %v798
        %v800 = vpop.xlane.xlu0 %799
        %v801 = vrcp.pop 32.0
        %v802 = vmul.f32 %v797, %v801
        %v803 = vmul.f32 %v800, %v801
        %v804 = vsub.f32 %v790, %v802
        %v805 = vsub.f32 %v791, %v803
        %v806 = vmul.f32 %v804, %v804
        %v807 = vmul.f32 %v805, %v805
        %v808 = vsel %vm794, %v806, 0.0
        %809 = vadd.xlane.f32.xlu0 %v808
        %v810 = vpop.xlane.xlu0 %809
        %v811 = vsel %vm794, %v807, 0.0
        %812 = vadd.xlane.f32.xlu0 %v811
        %v813 = vpop.xlane.xlu0 %812
        %v814 = vmul.f32 %v810, %v801
        %v815 = vmul.f32 %v813, %v801
        %v816 = vadd.f32 %v814, 1e-05
        %v817 = vadd.f32 %v815, 1e-05
        %v818 = vrsqrt.pop %v816
        %v819 = vrsqrt.pop %v817
        %v820 = vmul.f32 %v804, %v818
        %v821 = vmul.f32 %v805, %v819
        %v823 = vlaneseq
        %v824 = vshrl.u32 %v823, 7
        %v825 = vsub.s32 0, %v824
        %v826 = vrot.slane %v792, %v825
        %v828 = vmul.f32 %v820, %v826
        %v829 = vmul.f32 %v821, %v826
        %v831 = vlaneseq
        %v832 = vshrl.u32 %v831, 7
        %v833 = vsub.s32 0, %v832
        %v834 = vrot.slane %v793, %v833
        %v836 = vadd.f32 %v828, %v834
        %v837 = vadd.f32 %v829, %v834
        %v838 = vpack.c.bf16 %v837, %v836
        %v839 = vld [vmem:[%s750] sm:$0xf]
        %v840 = vld [vmem:[%s750 + $0x4] sm:$0xf]
        %v841 = vld [vmem:[%s750 + $0x8] sm:$0xf]
        %v842 = vld [vmem:[%s750 + $0xc] sm:$0xf]
        %v843 = vld [vmem:[%s753] sm:$0x1]
        %v845 = vlaneseq
        %v846 = vshrl.u32 %v845, 7
        %v847 = vsub.s32 0, %v846
        %v848 = vrot.slane %v843, %v847
        %v854 = vunpack.c.l.b16 %v839
        %v855 = vunpack.c.l.b16 %v840
        %v856 = vunpack.c.l.b16 %v841
        %v857 = vunpack.c.l.b16 %v842
        %v858 = vpack.c.b16 %v855, %v854
        %v859 = vpack.c.b16 %v857, %v856
        %v863 = vsel %vm794, %v838, 0
        %865 = vmatprep.subr.bf16.mxu0 0
        %866 = vmatpush1.bf16.msra.mxu0 %v858
        %867 = vmatprep.subr.bf16.mxu0 0
        %868 = vmatpush1.bf16.msra.mxu0 %v859
        %869 = vmatprep.subr.bf16.mxu0 0
        %870 = vmatpush1.bf16.msra.mxu0 0
        %871 = vmatprep.subr.bf16.mxu0 0
        %872 = vmatpush1.bf16.msra.mxu0 0
        %873 = vmatprep.subr.bf16.mxu0 0
        %874 = vmatpush1.bf16.msra.mxu0 0
        %875 = vmatprep.subr.bf16.mxu0 0
        %876 = vmatpush1.bf16.msra.mxu0 0
        %877 = vmatprep.subr.bf16.mxu0 0
        %878 = vmatpush1.bf16.msra.mxu0 0
        %879 = vmatprep.subr.bf16.mxu0 0
        %880 = vmatpush1.bf16.msra.mxu0 0
        %881 = vmatprep.subr.bf16.mxu0 0
        %882 = vmatpush1.bf16.msra.mxu0 0
        %883 = vmatprep.subr.bf16.mxu0 0
        %884 = vmatpush1.bf16.msra.mxu0 0
        %885 = vmatprep.subr.bf16.mxu0 0
        %886 = vmatpush1.bf16.msra.mxu0 0
        %887 = vmatprep.subr.bf16.mxu0 0
        %888 = vmatpush1.bf16.msra.mxu0 0
        %889 = vmatprep.subr.bf16.mxu0 0
        %890 = vmatpush1.bf16.msra.mxu0 0
        %891 = vmatprep.subr.bf16.mxu0 0
        %892 = vmatpush1.bf16.msra.mxu0 0
        %893 = vmatprep.subr.bf16.mxu0 0
        %894 = vmatpush1.bf16.msra.mxu0 0
        %895 = vmatprep.subr.bf16.mxu0 0
        %896 = vmatpush1.bf16.msra.mxu0 0
        %897 = vmatprep.mubr.bf16.mxu0 0
        %898 = vmatmul.mubr.bf16.gmra.mrb[0].mxu0 %v863
        %v899 = vpop.f32.mrb[0].mxu0
        %v900 = vadd.f32 %v848, %v899
        %v901 = vpop.f32.mrb[0].mxu0
        %v902 = vpop.f32.mrb[0].mxu0
        %v903 = vadd.f32 %v848, %v902
        %v904 = vpop.f32.mrb[0].mxu0
        %905 = vdwg.mxu0
        %v906 = vmul.f32 %v900, 0.35355338
        %v907 = vmul.f32 %v903, 0.35355338
        %v908 = vpack.c.bf16 %v907, %v906
        %v909 = vpack.c.bf16 %v903, %v900
        %911 = vrot.lane.b32.xlu0 %v908, 120
        %v912 = vpop.permute.xlu0 %911
        %913 = vrot.lane.b32.xlu0 %v908, 112
        %v914 = vpop.permute.xlu0 %913
        %915 = vrot.lane.b32.xlu0 %v908, 104
        %v916 = vpop.permute.xlu0 %915
        %918 = vrot.lane.b32.xlu0 %v909, 120
        %v919 = vpop.permute.xlu0 %918
        %920 = vrot.lane.b32.xlu0 %v909, 112
        %v921 = vpop.permute.xlu0 %920
        %922 = vrot.lane.b32.xlu0 %v909, 104
        %v923 = vpop.permute.xlu0 %922
        %924 = vrot.lane.b32.xlu0 %v909, 96
        %v925 = vpop.permute.xlu0 %924
        %vm926 = vcmask 64512
        %v928 = vsel %vm926, %v908, 0
        %v931 = vsel %vm926, %v925, 0
        %933 = vmatprep.subr.bf16.mxu0 0
        %934 = vmatpush1.bf16.xpose.msra.mxu0 %v931
        %935 = vmatprep.subr.bf16.mxu0 0
        %936 = vmatpush1.bf16.xpose.msra.mxu0 0
        %937 = vmatprep.subr.bf16.mxu0 0
        %938 = vmatpush1.bf16.xpose.msra.mxu0 0
        %939 = vmatprep.subr.bf16.mxu0 0
        %940 = vmatpush1.bf16.xpose.msra.mxu0 0
        %941 = vmatprep.subr.bf16.mxu0 0
        %942 = vmatpush1.bf16.xpose.msra.mxu0 0
        %943 = vmatprep.subr.bf16.mxu0 0
        %944 = vmatpush1.bf16.xpose.msra.mxu0 0
        %945 = vmatprep.subr.bf16.mxu0 0
        %946 = vmatpush1.bf16.xpose.msra.mxu0 0
        %947 = vmatprep.subr.bf16.mxu0 0
        %948 = vmatpush1.bf16.xpose.msra.mxu0 0
        %949 = vmatprep.subr.bf16.mxu0 0
        %950 = vmatpush1.bf16.xpose.msra.mxu0 0
        %951 = vmatprep.subr.bf16.mxu0 0
        %952 = vmatpush1.bf16.xpose.msra.mxu0 0
        %953 = vmatprep.subr.bf16.mxu0 0
        %954 = vmatpush1.bf16.xpose.msra.mxu0 0
        %955 = vmatprep.subr.bf16.mxu0 0
        %956 = vmatpush1.bf16.xpose.msra.mxu0 0
        %957 = vmatprep.subr.bf16.mxu0 0
        %958 = vmatpush1.bf16.xpose.msra.mxu0 0
        %959 = vmatprep.subr.bf16.mxu0 0
        %960 = vmatpush1.bf16.xpose.msra.mxu0 0
        %961 = vmatprep.subr.bf16.mxu0 0
        %962 = vmatpush1.bf16.xpose.msra.mxu0 0
        %963 = vmatprep.subr.bf16.mxu0 0
        %964 = vmatpush1.bf16.xpose.msra.mxu0 0
        %965 = vmatprep.mubr.bf16.mxu0 0
        %966 = vmatmul.mubr.bf16.gmra.mrb[0].mxu0 %v928
        %v967 = vpop.f32.mrb[0].mxu0
        %v968 = vadd.f32 0.0, %v967
        %v969 = vpop.f32.mrb[0].mxu0
        %v970 = vpop.f32.mrb[0].mxu0
        %v971 = vadd.f32 0.0, %v970
        %v972 = vpop.f32.mrb[0].mxu0
        %973 = vdwg.mxu0
        %974 = vrot.lane.b32.xlu0 %v919, 96
        %v975 = vpop.permute.xlu0 %974
        %v977 = vsel %vm926, %v912, 0
        %v980 = vsel %vm926, %v975, 0
        %982 = vmatprep.subr.bf16.mxu0 0
        %983 = vmatpush1.bf16.xpose.msra.mxu0 %v980
        %984 = vmatprep.subr.bf16.mxu0 0
        %985 = vmatpush1.bf16.xpose.msra.mxu0 0
        %986 = vmatprep.subr.bf16.mxu0 0
        %987 = vmatpush1.bf16.xpose.msra.mxu0 0
        %988 = vmatprep.subr.bf16.mxu0 0
        %989 = vmatpush1.bf16.xpose.msra.mxu0 0
        %990 = vmatprep.subr.bf16.mxu0 0
        %991 = vmatpush1.bf16.xpose.msra.mxu0 0
        %992 = vmatprep.subr.bf16.mxu0 0
        %993 = vmatpush1.bf16.xpose.msra.mxu0 0
        %994 = vmatprep.subr.bf16.mxu0 0
        %995 = vmatpush1.bf16.xpose.msra.mxu0 0
        %996 = vmatprep.subr.bf16.mxu0 0
        %997 = vmatpush1.bf16.xpose.msra.mxu0 0
        %998 = vmatprep.subr.bf16.mxu0 0
        %999 = vmatpush1.bf16.xpose.msra.mxu0 0
        %1000 = vmatprep.subr.bf16.mxu0 0
        %1001 = vmatpush1.bf16.xpose.msra.mxu0 0
        %1002 = vmatprep.subr.bf16.mxu0 0
        %1003 = vmatpush1.bf16.xpose.msra.mxu0 0
        %1004 = vmatprep.subr.bf16.mxu0 0
        %1005 = vmatpush1.bf16.xpose.msra.mxu0 0
        %1006 = vmatprep.subr.bf16.mxu0 0
        %1007 = vmatpush1.bf16.xpose.msra.mxu0 0
        %1008 = vmatprep.subr.bf16.mxu0 0
        %1009 = vmatpush1.bf16.xpose.msra.mxu0 0
        %1010 = vmatprep.subr.bf16.mxu0 0
        %1011 = vmatpush1.bf16.xpose.msra.mxu0 0
        %1012 = vmatprep.subr.bf16.mxu0 0
        %1013 = vmatpush1.bf16.xpose.msra.mxu0 0
        %1014 = vmatprep.mubr.bf16.mxu0 0
        %1015 = vmatmul.mubr.bf16.gmra.mrb[0].mxu0 %v977
        %v1016 = vpop.f32.mrb[0].mxu0
        %v1017 = vadd.f32 0.0, %v1016
        %v1018 = vpop.f32.mrb[0].mxu0
        %v1019 = vpop.f32.mrb[0].mxu0
        %v1020 = vadd.f32 0.0, %v1019
        %v1021 = vpop.f32.mrb[0].mxu0
        %1022 = vdwg.mxu0
        %1023 = vrot.lane.b32.xlu0 %v921, 96
        %v1024 = vpop.permute.xlu0 %1023
        %v1026 = vsel %vm926, %v914, 0
        %v1029 = vsel %vm926, %v1024, 0
        %1031 = vmatprep.subr.bf16.mxu0 0
        %1032 = vmatpush1.bf16.xpose.msra.mxu0 %v1029
        %1033 = vmatprep.subr.bf16.mxu0 0
        %1034 = vmatpush1.bf16.xpose.msra.mxu0 0
        %1035 = vmatprep.subr.bf16.mxu0 0
        %1036 = vmatpush1.bf16.xpose.msra.mxu0 0
        %1037 = vmatprep.subr.bf16.mxu0 0
        %1038 = vmatpush1.bf16.xpose.msra.mxu0 0
        %1039 = vmatprep.subr.bf16.mxu0 0
        %1040 = vmatpush1.bf16.xpose.msra.mxu0 0
        %1041 = vmatprep.subr.bf16.mxu0 0
        %1042 = vmatpush1.bf16.xpose.msra.mxu0 0
        %1043 = vmatprep.subr.bf16.mxu0 0
        %1044 = vmatpush1.bf16.xpose.msra.mxu0 0
        %1045 = vmatprep.subr.bf16.mxu0 0
        %1046 = vmatpush1.bf16.xpose.msra.mxu0 0
        %1047 = vmatprep.subr.bf16.mxu0 0
        %1048 = vmatpush1.bf16.xpose.msra.mxu0 0
        %1049 = vmatprep.subr.bf16.mxu0 0
        %1050 = vmatpush1.bf16.xpose.msra.mxu0 0
        %1051 = vmatprep.subr.bf16.mxu0 0
        %1052 = vmatpush1.bf16.xpose.msra.mxu0 0
        %1053 = vmatprep.subr.bf16.mxu0 0
        %1054 = vmatpush1.bf16.xpose.msra.mxu0 0
        %1055 = vmatprep.subr.bf16.mxu0 0
        %1056 = vmatpush1.bf16.xpose.msra.mxu0 0
        %1057 = vmatprep.subr.bf16.mxu0 0
        %1058 = vmatpush1.bf16.xpose.msra.mxu0 0
        %1059 = vmatprep.subr.bf16.mxu0 0
        %1060 = vmatpush1.bf16.xpose.msra.mxu0 0
        %1061 = vmatprep.subr.bf16.mxu0 0
        %1062 = vmatpush1.bf16.xpose.msra.mxu0 0
        %1063 = vmatprep.mubr.bf16.mxu0 0
        %1064 = vmatmul.mubr.bf16.gmra.mrb[0].mxu0 %v1026
        %v1065 = vpop.f32.mrb[0].mxu0
        %v1066 = vadd.f32 0.0, %v1065
        %v1067 = vpop.f32.mrb[0].mxu0
        %v1068 = vpop.f32.mrb[0].mxu0
        %v1069 = vadd.f32 0.0, %v1068
        %v1070 = vpop.f32.mrb[0].mxu0
        %1071 = vdwg.mxu0
        %1072 = vrot.lane.b32.xlu0 %v923, 96
        %v1073 = vpop.permute.xlu0 %1072
        %v1075 = vsel %vm926, %v916, 0
        %v1078 = vsel %vm926, %v1073, 0
        %1080 = vmatprep.subr.bf16.mxu0 0
        %1081 = vmatpush1.bf16.xpose.msra.mxu0 %v1078
        %1082 = vmatprep.subr.bf16.mxu0 0
        %1083 = vmatpush1.bf16.xpose.msra.mxu0 0
        %1084 = vmatprep.subr.bf16.mxu0 0
        %1085 = vmatpush1.bf16.xpose.msra.mxu0 0
        %1086 = vmatprep.subr.bf16.mxu0 0
        %1087 = vmatpush1.bf16.xpose.msra.mxu0 0
        %1088 = vmatprep.subr.bf16.mxu0 0
        %1089 = vmatpush1.bf16.xpose.msra.mxu0 0
        %1090 = vmatprep.subr.bf16.mxu0 0
        %1091 = vmatpush1.bf16.xpose.msra.mxu0 0
        %1092 = vmatprep.subr.bf16.mxu0 0
        %1093 = vmatpush1.bf16.xpose.msra.mxu0 0
        %1094 = vmatprep.subr.bf16.mxu0 0
        %1095 = vmatpush1.bf16.xpose.msra.mxu0 0
        %1096 = vmatprep.subr.bf16.mxu0 0
        %1097 = vmatpush1.bf16.xpose.msra.mxu0 0
        %1098 = vmatprep.subr.bf16.mxu0 0
        %1099 = vmatpush1.bf16.xpose.msra.mxu0 0
        %1100 = vmatprep.subr.bf16.mxu0 0
        %1101 = vmatpush1.bf16.xpose.msra.mxu0 0
        %1102 = vmatprep.subr.bf16.mxu0 0
        %1103 = vmatpush1.bf16.xpose.msra.mxu0 0
        %1104 = vmatprep.subr.bf16.mxu0 0
        %1105 = vmatpush1.bf16.xpose.msra.mxu0 0
        %1106 = vmatprep.subr.bf16.mxu0 0
        %1107 = vmatpush1.bf16.xpose.msra.mxu0 0
        %1108 = vmatprep.subr.bf16.mxu0 0
        %1109 = vmatpush1.bf16.xpose.msra.mxu0 0
        %1110 = vmatprep.subr.bf16.mxu0 0
        %1111 = vmatpush1.bf16.xpose.msra.mxu0 0
        %1112 = vmatprep.mubr.bf16.mxu0 0
        %1113 = vmatmul.mubr.bf16.gmra.mrb[0].mxu0 %v1075
        %v1114 = vpop.f32.mrb[0].mxu0
        %v1115 = vadd.f32 0.0, %v1114
        %v1116 = vpop.f32.mrb[0].mxu0
        %v1117 = vpop.f32.mrb[0].mxu0
        %v1118 = vadd.f32 0.0, %v1117
        %v1119 = vpop.f32.mrb[0].mxu0
        %1120 = vdwg.mxu0
        %vm1121 = vcmask 130048
        %v1122 = vsel %vm1121, %v968, -inf
        %1123 = vmax.xlane.f32.xlu0 %v1122
        %v1124 = vpop.xlane.xlu0 %1123
        %v1125 = vsel %vm1121, %v971, -inf
        %1126 = vmax.xlane.f32.xlu0 %v1125
        %v1127 = vpop.xlane.xlu0 %1126
        %v1128 = vsel %vm1121, %v1017, -inf
        %1129 = vmax.xlane.f32.xlu0 %v1128
        %v1130 = vpop.xlane.xlu0 %1129
        %v1131 = vsel %vm1121, %v1020, -inf
        %1132 = vmax.xlane.f32.xlu0 %v1131
        %v1133 = vpop.xlane.xlu0 %1132
        %v1134 = vsel %vm1121, %v1066, -inf
        %1135 = vmax.xlane.f32.xlu0 %v1134
        %v1136 = vpop.xlane.xlu0 %1135
        %v1137 = vsel %vm1121, %v1069, -inf
        %1138 = vmax.xlane.f32.xlu0 %v1137
        %v1139 = vpop.xlane.xlu0 %1138
        %v1140 = vsel %vm1121, %v1115, -inf
        %1141 = vmax.xlane.f32.xlu0 %v1140
        %v1142 = vpop.xlane.xlu0 %1141
        %v1143 = vsel %vm1121, %v1118, -inf
        %1144 = vmax.xlane.f32.xlu0 %v1143
        %v1145 = vpop.xlane.xlu0 %1144
        %v1146 = vsub.f32 %v968, %v1124
        %v1147 = vsub.f32 %v971, %v1127
        %v1148 = vsub.f32 %v1017, %v1130
        %v1149 = vsub.f32 %v1020, %v1133
        %v1150 = vsub.f32 %v1066, %v1136
        %v1151 = vsub.f32 %v1069, %v1139
        %v1152 = vsub.f32 %v1115, %v1142
        %v1153 = vsub.f32 %v1118, %v1145
        %v1154 = vmul.f32 %v1146, 1.442695
        %v1155 = vpow.pop %v1154
        %v1156 = vmul.f32 %v1147, 1.442695
        %v1157 = vpow.pop %v1156
        %v1158 = vmul.f32 %v1148, 1.442695
        %v1159 = vpow.pop %v1158
        %v1160 = vmul.f32 %v1149, 1.442695
        %v1161 = vpow.pop %v1160
        %v1162 = vmul.f32 %v1150, 1.442695
        %v1163 = vpow.pop %v1162
        %v1164 = vmul.f32 %v1151, 1.442695
        %v1165 = vpow.pop %v1164
        %v1166 = vmul.f32 %v1152, 1.442695
        %v1167 = vpow.pop %v1166
        %v1168 = vmul.f32 %v1153, 1.442695
        %v1169 = vpow.pop %v1168
        %v1170 = vsel %vm1121, %v1155, 0.0
        %1171 = vadd.xlane.f32.xlu0 %v1170
        %v1172 = vpop.xlane.xlu0 %1171
        %v1173 = vsel %vm1121, %v1157, 0.0
        %1174 = vadd.xlane.f32.xlu0 %v1173
        %v1175 = vpop.xlane.xlu0 %1174
        %v1176 = vsel %vm1121, %v1159, 0.0
        %1177 = vadd.xlane.f32.xlu0 %v1176
        %v1178 = vpop.xlane.xlu0 %1177
        %v1179 = vsel %vm1121, %v1161, 0.0
        %1180 = vadd.xlane.f32.xlu0 %v1179
        %v1181 = vpop.xlane.xlu0 %1180
        %v1182 = vsel %vm1121, %v1163, 0.0
        %1183 = vadd.xlane.f32.xlu0 %v1182
        %v1184 = vpop.xlane.xlu0 %1183
        %v1185 = vsel %vm1121, %v1165, 0.0
        %1186 = vadd.xlane.f32.xlu0 %v1185
        %v1187 = vpop.xlane.xlu0 %1186
        %v1188 = vsel %vm1121, %v1167, 0.0
        %1189 = vadd.xlane.f32.xlu0 %v1188
        %v1190 = vpop.xlane.xlu0 %1189
        %v1191 = vsel %vm1121, %v1169, 0.0
        %1192 = vadd.xlane.f32.xlu0 %v1191
        %v1193 = vpop.xlane.xlu0 %1192
        %v1194 = vrcp.pop %v1172
        %v1195 = vmul.f32 %v1155, %v1194
        %v1196 = vrcp.pop %v1175
        %v1197 = vmul.f32 %v1157, %v1196
        %v1198 = vrcp.pop %v1178
        %v1199 = vmul.f32 %v1159, %v1198
        %v1200 = vrcp.pop %v1181
        %v1201 = vmul.f32 %v1161, %v1200
        %v1202 = vrcp.pop %v1184
        %v1203 = vmul.f32 %v1163, %v1202
        %v1204 = vrcp.pop %v1187
        %v1205 = vmul.f32 %v1165, %v1204
        %v1206 = vrcp.pop %v1190
        %v1207 = vmul.f32 %v1167, %v1206
        %v1208 = vrcp.pop %v1193
        %v1209 = vmul.f32 %v1169, %v1208
        %v1210 = vpack.c.bf16 %v1197, %v1195
        %v1211 = vpack.c.bf16 %v1201, %v1199
        %v1212 = vpack.c.bf16 %v1205, %v1203
        %v1213 = vpack.c.bf16 %v1209, %v1207
        %1214 = vrot.lane.b32.xlu0 %v909, 64
        %v1215 = vpop.permute.xlu0 %1214
        %v1218 = vsel %vm1121, %v1210, 0
        %1220 = vmatprep.subr.bf16.mxu0 0
        %1221 = vmatpush1.bf16.msra.mxu0 %v1215
        %1222 = vmatprep.subr.bf16.mxu0 0
        %1223 = vmatpush1.bf16.msra.mxu0 0
        %1224 = vmatprep.subr.bf16.mxu0 0
        %1225 = vmatpush1.bf16.msra.mxu0 0
        %1226 = vmatprep.subr.bf16.mxu0 0
        %1227 = vmatpush1.bf16.msra.mxu0 0
        %1228 = vmatprep.subr.bf16.mxu0 0
        %1229 = vmatpush1.bf16.msra.mxu0 0
        %1230 = vmatprep.subr.bf16.mxu0 0
        %1231 = vmatpush1.bf16.msra.mxu0 0
        %1232 = vmatprep.subr.bf16.mxu0 0
        %1233 = vmatpush1.bf16.msra.mxu0 0
        %1234 = vmatprep.subr.bf16.mxu0 0
        %1235 = vmatpush1.bf16.msra.mxu0 0
        %1236 = vmatprep.subr.bf16.mxu0 0
        %1237 = vmatpush1.bf16.msra.mxu0 0
        %1238 = vmatprep.subr.bf16.mxu0 0
        %1239 = vmatpush1.bf16.msra.mxu0 0
        %1240 = vmatprep.subr.bf16.mxu0 0
        %1241 = vmatpush1.bf16.msra.mxu0 0
        %1242 = vmatprep.subr.bf16.mxu0 0
        %1243 = vmatpush1.bf16.msra.mxu0 0
        %1244 = vmatprep.subr.bf16.mxu0 0
        %1245 = vmatpush1.bf16.msra.mxu0 0
        %1246 = vmatprep.subr.bf16.mxu0 0
        %1247 = vmatpush1.bf16.msra.mxu0 0
        %1248 = vmatprep.subr.bf16.mxu0 0
        %1249 = vmatpush1.bf16.msra.mxu0 0
        %1250 = vmatprep.subr.bf16.mxu0 0
        %1251 = vmatpush1.bf16.msra.mxu0 0
        %1252 = vmatprep.mubr.bf16.mxu0 0
        %1253 = vmatmul.mubr.bf16.gmra.mrb[0].mxu0 %v1218
        %v1254 = vpop.f32.mrb[0].mxu0
        %v1255 = vadd.f32 0.0, %v1254
        %v1256 = vpop.f32.mrb[0].mxu0
        %v1257 = vpop.f32.mrb[0].mxu0
        %v1258 = vadd.f32 0.0, %v1257
        %v1259 = vpop.f32.mrb[0].mxu0
        %1260 = vdwg.mxu0
        %1261 = vrot.lane.b32.xlu0 %v919, 64
        %v1262 = vpop.permute.xlu0 %1261
        %v1265 = vsel %vm1121, %v1211, 0
        %1267 = vmatprep.subr.bf16.mxu0 0
        %1268 = vmatpush1.bf16.msra.mxu0 %v1262
        %1269 = vmatprep.subr.bf16.mxu0 0
        %1270 = vmatpush1.bf16.msra.mxu0 0
        %1271 = vmatprep.subr.bf16.mxu0 0
        %1272 = vmatpush1.bf16.msra.mxu0 0
        %1273 = vmatprep.subr.bf16.mxu0 0
        %1274 = vmatpush1.bf16.msra.mxu0 0
        %1275 = vmatprep.subr.bf16.mxu0 0
        %1276 = vmatpush1.bf16.msra.mxu0 0
        %1277 = vmatprep.subr.bf16.mxu0 0
        %1278 = vmatpush1.bf16.msra.mxu0 0
        %1279 = vmatprep.subr.bf16.mxu0 0
        %1280 = vmatpush1.bf16.msra.mxu0 0
        %1281 = vmatprep.subr.bf16.mxu0 0
        %1282 = vmatpush1.bf16.msra.mxu0 0
        %1283 = vmatprep.subr.bf16.mxu0 0
        %1284 = vmatpush1.bf16.msra.mxu0 0
        %1285 = vmatprep.subr.bf16.mxu0 0
        %1286 = vmatpush1.bf16.msra.mxu0 0
        %1287 = vmatprep.subr.bf16.mxu0 0
        %1288 = vmatpush1.bf16.msra.mxu0 0
        %1289 = vmatprep.subr.bf16.mxu0 0
        %1290 = vmatpush1.bf16.msra.mxu0 0
        %1291 = vmatprep.subr.bf16.mxu0 0
        %1292 = vmatpush1.bf16.msra.mxu0 0
        %1293 = vmatprep.subr.bf16.mxu0 0
        %1294 = vmatpush1.bf16.msra.mxu0 0
        %1295 = vmatprep.subr.bf16.mxu0 0
        %1296 = vmatpush1.bf16.msra.mxu0 0
        %1297 = vmatprep.subr.bf16.mxu0 0
        %1298 = vmatpush1.bf16.msra.mxu0 0
        %1299 = vmatprep.mubr.bf16.mxu0 0
        %1300 = vmatmul.mubr.bf16.gmra.mrb[0].mxu0 %v1265
        %v1301 = vpop.f32.mrb[0].mxu0
        %v1302 = vadd.f32 0.0, %v1301
        %v1303 = vpop.f32.mrb[0].mxu0
        %v1304 = vpop.f32.mrb[0].mxu0
        %v1305 = vadd.f32 0.0, %v1304
        %v1306 = vpop.f32.mrb[0].mxu0
        %1307 = vdwg.mxu0
        %1308 = vrot.lane.b32.xlu0 %v921, 64
        %v1309 = vpop.permute.xlu0 %1308
        %v1312 = vsel %vm1121, %v1212, 0
        %1314 = vmatprep.subr.bf16.mxu0 0
        %1315 = vmatpush1.bf16.msra.mxu0 %v1309
        %1316 = vmatprep.subr.bf16.mxu0 0
        %1317 = vmatpush1.bf16.msra.mxu0 0
        %1318 = vmatprep.subr.bf16.mxu0 0
        %1319 = vmatpush1.bf16.msra.mxu0 0
        %1320 = vmatprep.subr.bf16.mxu0 0
        %1321 = vmatpush1.bf16.msra.mxu0 0
        %1322 = vmatprep.subr.bf16.mxu0 0
        %1323 = vmatpush1.bf16.msra.mxu0 0
        %1324 = vmatprep.subr.bf16.mxu0 0
        %1325 = vmatpush1.bf16.msra.mxu0 0
        %1326 = vmatprep.subr.bf16.mxu0 0
        %1327 = vmatpush1.bf16.msra.mxu0 0
        %1328 = vmatprep.subr.bf16.mxu0 0
        %1329 = vmatpush1.bf16.msra.mxu0 0
        %1330 = vmatprep.subr.bf16.mxu0 0
        %1331 = vmatpush1.bf16.msra.mxu0 0
        %1332 = vmatprep.subr.bf16.mxu0 0
        %1333 = vmatpush1.bf16.msra.mxu0 0
        %1334 = vmatprep.subr.bf16.mxu0 0
        %1335 = vmatpush1.bf16.msra.mxu0 0
        %1336 = vmatprep.subr.bf16.mxu0 0
        %1337 = vmatpush1.bf16.msra.mxu0 0
        %1338 = vmatprep.subr.bf16.mxu0 0
        %1339 = vmatpush1.bf16.msra.mxu0 0
        %1340 = vmatprep.subr.bf16.mxu0 0
        %1341 = vmatpush1.bf16.msra.mxu0 0
        %1342 = vmatprep.subr.bf16.mxu0 0
        %1343 = vmatpush1.bf16.msra.mxu0 0
        %1344 = vmatprep.subr.bf16.mxu0 0
        %1345 = vmatpush1.bf16.msra.mxu0 0
        %1346 = vmatprep.mubr.bf16.mxu0 0
        %1347 = vmatmul.mubr.bf16.gmra.mrb[0].mxu0 %v1312
        %v1348 = vpop.f32.mrb[0].mxu0
        %v1349 = vadd.f32 0.0, %v1348
        %v1350 = vpop.f32.mrb[0].mxu0
        %v1351 = vpop.f32.mrb[0].mxu0
        %v1352 = vadd.f32 0.0, %v1351
        %v1353 = vpop.f32.mrb[0].mxu0
        %1354 = vdwg.mxu0
        %1355 = vrot.lane.b32.xlu0 %v923, 64
        %v1356 = vpop.permute.xlu0 %1355
        %v1359 = vsel %vm1121, %v1213, 0
        %1361 = vmatprep.subr.bf16.mxu0 0
        %1362 = vmatpush1.bf16.msra.mxu0 %v1356
        %1363 = vmatprep.subr.bf16.mxu0 0
        %1364 = vmatpush1.bf16.msra.mxu0 0
        %1365 = vmatprep.subr.bf16.mxu0 0
        %1366 = vmatpush1.bf16.msra.mxu0 0
        %1367 = vmatprep.subr.bf16.mxu0 0
        %1368 = vmatpush1.bf16.msra.mxu0 0
        %1369 = vmatprep.subr.bf16.mxu0 0
        %1370 = vmatpush1.bf16.msra.mxu0 0
        %1371 = vmatprep.subr.bf16.mxu0 0
        %1372 = vmatpush1.bf16.msra.mxu0 0
        %1373 = vmatprep.subr.bf16.mxu0 0
        %1374 = vmatpush1.bf16.msra.mxu0 0
        %1375 = vmatprep.subr.bf16.mxu0 0
        %1376 = vmatpush1.bf16.msra.mxu0 0
        %1377 = vmatprep.subr.bf16.mxu0 0
        %1378 = vmatpush1.bf16.msra.mxu0 0
        %1379 = vmatprep.subr.bf16.mxu0 0
        %1380 = vmatpush1.bf16.msra.mxu0 0
        %1381 = vmatprep.subr.bf16.mxu0 0
        %1382 = vmatpush1.bf16.msra.mxu0 0
        %1383 = vmatprep.subr.bf16.mxu0 0
        %1384 = vmatpush1.bf16.msra.mxu0 0
        %1385 = vmatprep.subr.bf16.mxu0 0
        %1386 = vmatpush1.bf16.msra.mxu0 0
        %1387 = vmatprep.subr.bf16.mxu0 0
        %1388 = vmatpush1.bf16.msra.mxu0 0
        %1389 = vmatprep.subr.bf16.mxu0 0
        %1390 = vmatpush1.bf16.msra.mxu0 0
        %1391 = vmatprep.subr.bf16.mxu0 0
        %1392 = vmatpush1.bf16.msra.mxu0 0
        %1393 = vmatprep.mubr.bf16.mxu0 0
        %1394 = vmatmul.mubr.bf16.gmra.mrb[0].mxu0 %v1359
        %v1395 = vpop.f32.mrb[0].mxu0
        %v1396 = vadd.f32 0.0, %v1395
        %v1397 = vpop.f32.mrb[0].mxu0
        %v1398 = vpop.f32.mrb[0].mxu0
        %v1399 = vadd.f32 0.0, %v1398
        %v1400 = vpop.f32.mrb[0].mxu0
        %1401 = vdwg.mxu0
        %1404 = vrot.lane.b32.xlu0 %v1302, 8
        %v1405 = vpop.permute.xlu0 %1404
        %1406 = vrot.lane.b32.xlu0 %v1305, 8
        %v1407 = vpop.permute.xlu0 %1406
        %1412 = vrot.lane.b32.xlu0 %v1349, 16
        %v1413 = vpop.permute.xlu0 %1412
        %1414 = vrot.lane.b32.xlu0 %v1352, 16
        %v1415 = vpop.permute.xlu0 %1414
        %1420 = vrot.lane.b32.xlu0 %v1396, 24
        %v1421 = vpop.permute.xlu0 %1420
        %1422 = vrot.lane.b32.xlu0 %v1399, 24
        %v1423 = vpop.permute.xlu0 %1422
        %v1426 = vsel %vm926, %v1255, %v1405
        %v1427 = vsel %vm926, %v1258, %v1407
        %v1428 = vsel %vm1121, %v1426, %v1413
        %v1429 = vsel %vm1121, %v1427, %v1415
        %vm1430 = vcmask 195584
        %v1431 = vsel %vm1430, %v1428, %v1421
        %v1432 = vsel %vm1430, %v1429, %v1423
        %v1433 = vpack.c.bf16 %v1432, %v1431
        %v1434 = vld [vmem:[%s758] sm:$0xf]
        %v1435 = vld [vmem:[%s758 + $0x4] sm:$0xf]
        %v1436 = vld [vmem:[%s758 + $0x8] sm:$0xf]
        %v1437 = vld [vmem:[%s758 + $0xc] sm:$0xf]
        %v1438 = vld [vmem:[%s761] sm:$0x1]
        %v1440 = vlaneseq
        %v1441 = vshrl.u32 %v1440, 7
        %v1442 = vsub.s32 0, %v1441
        %v1443 = vrot.slane %v1438, %v1442
        %v1449 = vunpack.c.l.b16 %v1434
        %v1450 = vunpack.c.l.b16 %v1435
        %v1451 = vunpack.c.l.b16 %v1436
        %v1452 = vunpack.c.l.b16 %v1437
        %v1453 = vpack.c.b16 %v1450, %v1449
        %v1454 = vpack.c.b16 %v1452, %v1451
        %v1458 = vsel %vm794, %v1433, 0
        %1460 = vmatprep.subr.bf16.mxu0 0
        %1461 = vmatpush1.bf16.msra.mxu0 %v1453
        %1462 = vmatprep.subr.bf16.mxu0 0
        %1463 = vmatpush1.bf16.msra.mxu0 %v1454
        %1464 = vmatprep.subr.bf16.mxu0 0
        %1465 = vmatpush1.bf16.msra.mxu0 0
        %1466 = vmatprep.subr.bf16.mxu0 0
        %1467 = vmatpush1.bf16.msra.mxu0 0
        %1468 = vmatprep.subr.bf16.mxu0 0
        %1469 = vmatpush1.bf16.msra.mxu0 0
        %1470 = vmatprep.subr.bf16.mxu0 0
        %1471 = vmatpush1.bf16.msra.mxu0 0
        %1472 = vmatprep.subr.bf16.mxu0 0
        %1473 = vmatpush1.bf16.msra.mxu0 0
        %1474 = vmatprep.subr.bf16.mxu0 0
        %1475 = vmatpush1.bf16.msra.mxu0 0
        %1476 = vmatprep.subr.bf16.mxu0 0
        %1477 = vmatpush1.bf16.msra.mxu0 0
        %1478 = vmatprep.subr.bf16.mxu0 0
        %1479 = vmatpush1.bf16.msra.mxu0 0
        %1480 = vmatprep.subr.bf16.mxu0 0
        %1481 = vmatpush1.bf16.msra.mxu0 0
        %1482 = vmatprep.subr.bf16.mxu0 0
        %1483 = vmatpush1.bf16.msra.mxu0 0
        %1484 = vmatprep.subr.bf16.mxu0 0
        %1485 = vmatpush1.bf16.msra.mxu0 0
        %1486 = vmatprep.subr.bf16.mxu0 0
        %1487 = vmatpush1.bf16.msra.mxu0 0
        %1488 = vmatprep.subr.bf16.mxu0 0
        %1489 = vmatpush1.bf16.msra.mxu0 0
        %1490 = vmatprep.subr.bf16.mxu0 0
        %1491 = vmatpush1.bf16.msra.mxu0 0
        %1492 = vmatprep.mubr.bf16.mxu0 0
        %1493 = vmatmul.mubr.bf16.gmra.mrb[0].mxu0 %v1458
        %v1494 = vpop.f32.mrb[0].mxu0
        %v1495 = vadd.f32 %v1443, %v1494
        %v1496 = vpop.f32.mrb[0].mxu0
        %v1497 = vpop.f32.mrb[0].mxu0
        %v1498 = vadd.f32 %v1443, %v1497
        %v1499 = vpop.f32.mrb[0].mxu0
        %1500 = vdwg.mxu0
        %v1501 = vadd.f32 %v1495, %v790
        %v1502 = vadd.f32 %v1498, %v791
        %v1503 = vld [vmem:[%s764] sm:$0x1]
        %v1504 = vld [vmem:[%s767] sm:$0x1]
        %v1505 = vsel %vm794, %v1501, 0.0
        %1506 = vadd.xlane.f32.xlu0 %v1505
        %v1507 = vpop.xlane.xlu0 %1506
        %v1508 = vsel %vm794, %v1502, 0.0
        %1509 = vadd.xlane.f32.xlu0 %v1508
        %v1510 = vpop.xlane.xlu0 %1509
        %v1511 = vmul.f32 %v1507, %v801
        %v1512 = vmul.f32 %v1510, %v801
        %v1513 = vsub.f32 %v1501, %v1511
        %v1514 = vsub.f32 %v1502, %v1512
        %v1515 = vmul.f32 %v1513, %v1513
        %v1516 = vmul.f32 %v1514, %v1514
        %v1517 = vsel %vm794, %v1515, 0.0
        %1518 = vadd.xlane.f32.xlu0 %v1517
        %v1519 = vpop.xlane.xlu0 %1518
        %v1520 = vsel %vm794, %v1516, 0.0
        %1521 = vadd.xlane.f32.xlu0 %v1520
        %v1522 = vpop.xlane.xlu0 %1521
        %v1523 = vmul.f32 %v1519, %v801
        %v1524 = vmul.f32 %v1522, %v801
        %v1525 = vadd.f32 %v1523, 1e-05
        %v1526 = vadd.f32 %v1524, 1e-05
        %v1527 = vrsqrt.pop %v1525
        %v1528 = vrsqrt.pop %v1526
        %v1529 = vmul.f32 %v1513, %v1527
        %v1530 = vmul.f32 %v1514, %v1528
        %v1532 = vlaneseq
        %v1533 = vshrl.u32 %v1532, 7
        %v1534 = vsub.s32 0, %v1533
        %v1535 = vrot.slane %v1503, %v1534
        %v1537 = vmul.f32 %v1529, %v1535
        %v1538 = vmul.f32 %v1530, %v1535
        %v1540 = vlaneseq
        %v1541 = vshrl.u32 %v1540, 7
        %v1542 = vsub.s32 0, %v1541
        %v1543 = vrot.slane %v1504, %v1542
        %v1545 = vadd.f32 %v1537, %v1543
        %v1546 = vadd.f32 %v1538, %v1543
        %v1547 = vpack.c.bf16 %v1546, %v1545
        %v1548 = vld [vmem:[%s633] sm:$0xf]
        %v1549 = vld [vmem:[%s633 + $0x4] sm:$0xf]
        %v1550 = vld [vmem:[%s633 + $0x8] sm:$0xf]
        %v1551 = vld [vmem:[%s633 + $0xc] sm:$0xf]
        %v1552 = vld [vmem:[%s641] sm:$0x1]
        %v1554 = vlaneseq
        %v1555 = vshrl.u32 %v1554, 7
        %v1556 = vsub.s32 0, %v1555
        %v1557 = vrot.slane %v1552, %v1556
        %v1563 = vunpack.c.l.b16 %v1548
        %v1564 = vunpack.c.l.b16 %v1549
        %v1565 = vunpack.c.l.b16 %v1550
        %v1566 = vunpack.c.l.b16 %v1551
        %v1567 = vpack.c.b16 %v1564, %v1563
        %v1568 = vpack.c.b16 %v1566, %v1565
        %v1572 = vsel %vm794, %v1547, 0
        %1574 = vmatprep.subr.bf16.mxu0 0
        %1575 = vmatpush1.bf16.msra.mxu0 %v1567
        %1576 = vmatprep.subr.bf16.mxu0 0
        %1577 = vmatpush1.bf16.msra.mxu0 %v1568
        %1578 = vmatprep.subr.bf16.mxu0 0
        %1579 = vmatpush1.bf16.msra.mxu0 0
        %1580 = vmatprep.subr.bf16.mxu0 0
        %1581 = vmatpush1.bf16.msra.mxu0 0
        %1582 = vmatprep.subr.bf16.mxu0 0
        %1583 = vmatpush1.bf16.msra.mxu0 0
        %1584 = vmatprep.subr.bf16.mxu0 0
        %1585 = vmatpush1.bf16.msra.mxu0 0
        %1586 = vmatprep.subr.bf16.mxu0 0
        %1587 = vmatpush1.bf16.msra.mxu0 0
        %1588 = vmatprep.subr.bf16.mxu0 0
        %1589 = vmatpush1.bf16.msra.mxu0 0
        %1590 = vmatprep.subr.bf16.mxu0 0
        %1591 = vmatpush1.bf16.msra.mxu0 0
        %1592 = vmatprep.subr.bf16.mxu0 0
        %1593 = vmatpush1.bf16.msra.mxu0 0
        %1594 = vmatprep.subr.bf16.mxu0 0
        %1595 = vmatpush1.bf16.msra.mxu0 0
        %1596 = vmatprep.subr.bf16.mxu0 0
        %1597 = vmatpush1.bf16.msra.mxu0 0
        %1598 = vmatprep.subr.bf16.mxu0 0
        %1599 = vmatpush1.bf16.msra.mxu0 0
        %1600 = vmatprep.subr.bf16.mxu0 0
        %1601 = vmatpush1.bf16.msra.mxu0 0
        %1602 = vmatprep.subr.bf16.mxu0 0
        %1603 = vmatpush1.bf16.msra.mxu0 0
        %1604 = vmatprep.subr.bf16.mxu0 0
        %1605 = vmatpush1.bf16.msra.mxu0 0
        %1606 = vmatprep.mubr.bf16.mxu0 0
        %1607 = vmatmul.mubr.bf16.gmra.mrb[0].mxu0 %v1572
        %v1608 = vpop.f32.mrb[0].mxu0
        %v1609 = vadd.f32 %v1557, %v1608
        %v1610 = vpop.f32.mrb[0].mxu0
        %v1611 = vpop.f32.mrb[0].mxu0
        %v1612 = vadd.f32 %v1557, %v1611
        %v1613 = vpop.f32.mrb[0].mxu0
        %1614 = vdwg.mxu0
        %v1615 = vmul.f32 %v1609, 0.5
        %v1616 = vmul.f32 %v1612, 0.5
        %v1617 = vmul.f32 %v1609, 0.70710677
        %v1618 = vmul.f32 %v1612, 0.70710677
        %vm1619 = vcmp.ge.f32.partialorder %v1617, 0.0
        %vm1620 = vcmp.ge.f32.partialorder %v1618, 0.0
        %v1621 = vsel %vm1619, 1.0, -1.0
        %v1622 = vsel %vm1620, 1.0, -1.0
        %v1623 = vand.u32 2147483647, %v1617
        %v1624 = vand.u32 2147483647, %v1618
        %v1625 = vmul.f32 %v1623, 0.3275911
        %v1626 = vmul.f32 %v1624, 0.3275911
        %v1627 = vadd.f32 %v1625, 1.0
        %v1628 = vadd.f32 %v1626, 1.0
        %v1629 = vrcp.pop %v1627
        %v1630 = vrcp.pop %v1628
        %v1631 = vmul.f32 %v1629, 1.0614054
        %v1632 = vmul.f32 %v1630, 1.0614054
        %v1633 = vadd.f32 %v1631, -1.4531521
        %v1634 = vadd.f32 %v1632, -1.4531521
        %v1635 = vmul.f32 %v1633, %v1629
        %v1636 = vmul.f32 %v1634, %v1630
        %v1637 = vadd.f32 %v1635, 1.4214138
        %v1638 = vadd.f32 %v1636, 1.4214138
        %v1639 = vmul.f32 %v1637, %v1629
        %v1640 = vmul.f32 %v1638, %v1630
        %v1641 = vadd.f32 %v1639, -0.28449672
        %v1642 = vadd.f32 %v1640, -0.28449672
        %v1643 = vmul.f32 %v1641, %v1629
        %v1644 = vmul.f32 %v1642, %v1630
        %v1645 = vadd.f32 %v1643, 0.2548296
        %v1646 = vadd.f32 %v1644, 0.2548296
        %v1647 = vmul.f32 %v1645, %v1629
        %v1648 = vmul.f32 %v1646, %v1630
        %v1649 = vsub.f32 0.0, %v1623
        %v1650 = vsub.f32 0.0, %v1624
        %v1651 = vmul.f32 %v1649, %v1623
        %v1652 = vmul.f32 %v1650, %v1624
        %v1653 = vmul.f32 %v1651, 1.442695
        %v1654 = vpow.pop %v1653
        %v1655 = vmul.f32 %v1652, 1.442695
        %v1656 = vpow.pop %v1655
        %v1657 = vmul.f32 %v1647, %v1654
        %v1658 = vmul.f32 %v1648, %v1656
        %v1659 = vsub.f32 1.0, %v1657
        %v1660 = vsub.f32 1.0, %v1658
        %v1661 = vmul.f32 %v1621, %v1659
        %v1662 = vmul.f32 %v1622, %v1660
        %v1663 = vadd.f32 %v1661, 1.0
        %v1664 = vadd.f32 %v1662, 1.0
        %v1665 = vmul.f32 %v1615, %v1663
        %v1666 = vmul.f32 %v1616, %v1664
        %v1667 = vpack.c.bf16 %v1666, %v1665
        %v1668 = vld [vmem:[%s772] sm:$0xf]
        %v1669 = vld [vmem:[%s772 + $0x4] sm:$0xf]
        %v1670 = vld [vmem:[%s772 + $0x8] sm:$0xf]
        %v1671 = vld [vmem:[%s772 + $0xc] sm:$0xf]
        %v1672 = vld [vmem:[%s772 + $0x10] sm:$0xf]
        %v1673 = vld [vmem:[%s772 + $0x14] sm:$0xf]
        %v1674 = vld [vmem:[%s772 + $0x18] sm:$0xf]
        %v1675 = vld [vmem:[%s772 + $0x1c] sm:$0xf]
        %v1676 = vld [vmem:[%s775] sm:$0x1]
        %v1678 = vlaneseq
        %v1679 = vshrl.u32 %v1678, 7
        %v1680 = vsub.s32 0, %v1679
        %v1681 = vrot.slane %v1676, %v1680
        %v1691 = vunpack.c.l.b16 %v1668
        %v1692 = vunpack.c.l.b16 %v1669
        %v1693 = vunpack.c.l.b16 %v1670
        %v1694 = vunpack.c.l.b16 %v1671
        %v1695 = vunpack.c.l.b16 %v1672
        %v1696 = vunpack.c.l.b16 %v1673
        %v1697 = vunpack.c.l.b16 %v1674
        %v1698 = vunpack.c.l.b16 %v1675
        %v1699 = vpack.c.b16 %v1692, %v1691
        %v1700 = vpack.c.b16 %v1694, %v1693
        %v1701 = vpack.c.b16 %v1696, %v1695
        %v1702 = vpack.c.b16 %v1698, %v1697
        %vm1707 = vcmask 523264
        %v1709 = vsel %vm1707, %v1667, 0
        %1711 = vmatprep.subr.bf16.mxu0 0
        %1712 = vmatpush1.bf16.msra.mxu0 %v1699
        %1713 = vmatprep.subr.bf16.mxu0 0
        %1714 = vmatpush1.bf16.msra.mxu0 %v1700
        %1715 = vmatprep.subr.bf16.mxu0 0
        %1716 = vmatpush1.bf16.msra.mxu0 %v1701
        %1717 = vmatprep.subr.bf16.mxu0 0
        %1718 = vmatpush1.bf16.msra.mxu0 %v1702
        %1719 = vmatprep.subr.bf16.mxu0 0
        %1720 = vmatpush1.bf16.msra.mxu0 0
        %1721 = vmatprep.subr.bf16.mxu0 0
        %1722 = vmatpush1.bf16.msra.mxu0 0
        %1723 = vmatprep.subr.bf16.mxu0 0
        %1724 = vmatpush1.bf16.msra.mxu0 0
        %1725 = vmatprep.subr.bf16.mxu0 0
        %1726 = vmatpush1.bf16.msra.mxu0 0
        %1727 = vmatprep.subr.bf16.mxu0 0
        %1728 = vmatpush1.bf16.msra.mxu0 0
        %1729 = vmatprep.subr.bf16.mxu0 0
        %1730 = vmatpush1.bf16.msra.mxu0 0
        %1731 = vmatprep.subr.bf16.mxu0 0
        %1732 = vmatpush1.bf16.msra.mxu0 0
        %1733 = vmatprep.subr.bf16.mxu0 0
        %1734 = vmatpush1.bf16.msra.mxu0 0
        %1735 = vmatprep.subr.bf16.mxu0 0
        %1736 = vmatpush1.bf16.msra.mxu0 0
        %1737 = vmatprep.subr.bf16.mxu0 0
        %1738 = vmatpush1.bf16.msra.mxu0 0
        %1739 = vmatprep.subr.bf16.mxu0 0
        %1740 = vmatpush1.bf16.msra.mxu0 0
        %1741 = vmatprep.subr.bf16.mxu0 0
        %1742 = vmatpush1.bf16.msra.mxu0 0
        %1743 = vmatprep.mubr.bf16.mxu0 0
        %1744 = vmatmul.mubr.bf16.gmra.mrb[0].mxu0 %v1709
        %v1745 = vpop.f32.mrb[0].mxu0
        %v1746 = vadd.f32 %v1681, %v1745
        %v1747 = vpop.f32.mrb[0].mxu0
        %v1748 = vpop.f32.mrb[0].mxu0
        %v1749 = vadd.f32 %v1681, %v1748
        %v1750 = vpop.f32.mrb[0].mxu0
        %1751 = vdwg.mxu0
        %v1752 = vadd.f32 %v1746, %v1501
        %v1753 = vadd.f32 %v1749, %v1502
        %1754 = vst.msk [vmem:[#allocation2] sm:$0xff] %vm794, %v1752
        %1755 = vst.msk [vmem:[#allocation2 + $0x8] sm:$0xff] %vm794, %v1753
        %p1756 = scmp.eq.s32.totalorder %s39, 1
        // Predicated region
        $region101: #{tpu_custom_call.1} parent=83 // pred_check
          %p1757 = pneg %p1756
        $region102: #{tpu_custom_call.1} parent=83 // pred_check_branch
          %1759 = sbr.rel (%p1757) target = $region104
        $region103: #{tpu_custom_call.1} parent=83 // pred_region
          %v1760 = vld [vmem:[%s14] sm:$0x1]
          %v1761 = vld [vmem:[%s15] sm:$0x1]
          %v1762 = vsel %vm794, %v1752, 0.0
          %1763 = vadd.xlane.f32.xlu0 %v1762
          %v1764 = vpop.xlane.xlu0 %1763
          %v1765 = vsel %vm794, %v1753, 0.0
          %1766 = vadd.xlane.f32.xlu0 %v1765
          %v1767 = vpop.xlane.xlu0 %1766
          %v1768 = vmul.f32 %v1764, %v801
          %v1769 = vmul.f32 %v1767, %v801
          %v1770 = vsub.f32 %v1752, %v1768
          %v1771 = vsub.f32 %v1753, %v1769
          %v1772 = vmul.f32 %v1770, %v1770
          %v1773 = vmul.f32 %v1771, %v1771
          %v1774 = vsel %vm794, %v1772, 0.0
          %1775 = vadd.xlane.f32.xlu0 %v1774
          %v1776 = vpop.xlane.xlu0 %1775
          %v1777 = vsel %vm794, %v1773, 0.0
          %1778 = vadd.xlane.f32.xlu0 %v1777
          %v1779 = vpop.xlane.xlu0 %1778
          %v1780 = vmul.f32 %v1776, %v801
          %v1781 = vmul.f32 %v1779, %v801
          %v1782 = vadd.f32 %v1780, 1e-05
          %v1783 = vadd.f32 %v1781, 1e-05
          %v1784 = vrsqrt.pop %v1782
          %v1785 = vrsqrt.pop %v1783
          %v1786 = vmul.f32 %v1770, %v1784
          %v1787 = vmul.f32 %v1771, %v1785
          %v1789 = vlaneseq
          %v1790 = vshrl.u32 %v1789, 7
          %v1791 = vsub.s32 0, %v1790
          %v1792 = vrot.slane %v1760, %v1791
          %v1794 = vmul.f32 %v1786, %v1792
          %v1795 = vmul.f32 %v1787, %v1792
          %v1797 = vlaneseq
          %v1798 = vshrl.u32 %v1797, 7
          %v1799 = vsub.s32 0, %v1798
          %v1800 = vrot.slane %v1761, %v1799
          %v1802 = vadd.f32 %v1794, %v1800
          %v1803 = vadd.f32 %v1795, %v1800
          %1804 = vst.msk [vmem:[%s734] sm:$0xff] %vm794, %v1802
          %1805 = vst.msk [vmem:[%s734 + $0x8] sm:$0xff] %vm794, %v1803
        $region104: #{tpu_custom_call.1} parent=83 // pred_fallthru
          _
        %s1806 = sand.u32 %s455, 1
        %s1807 = scalar_lea.sflag [#allocation5], %s1806
        %s1808 = sand.u32 %s455, 1
        %s1809 = smul.addr %s1808, 16
        %s1810 = scalar_lea.vmem [#allocation9], %s1809
        // Predicated region
        $region105: #{tpu_custom_call.1} parent=83 // pred_check
          %p1811 = pneg %p465
        $region106: #{tpu_custom_call.1} parent=83 // pred_check_branch
          %1813 = sbr.rel (%p1811) target = $region108
        $region107: #{tpu_custom_call.1} parent=83 // pred_region
          %s1815 = ssub.s32 256, 256
          %1816 = vsyncadd %s1807, %s1815
          %s1817 = smul.addr %s38, 2
          %s1818 = smul.addr %s1817, 128
          %s1819 = scalar_lea.hbm %s16, %s1818
          %s1820 = sshll.u32 %s1810, 4
          %s1821 = int_to_ptr.vmem [resolvable:$true] %s1820
          %1826 = dma.vmem_to_hbm [thread:$0]  %s1821, 256, %s1819, %s1807, 128, 128, 8
        $region108: #{tpu_custom_call.1} parent=83 // pred_fallthru
          _
      $region84: #{tpu_custom_call.1} parent=5 // pred_fallthru
        _
      %p1827 = scmp.le.s32.totalorder 2, %s29
      // Predicated region
      $region109: #{tpu_custom_call.1} parent=5 // pred_check
        %p1828 = pneg %p1827
      $region110: #{tpu_custom_call.1} parent=5 // pred_check_branch
        %1830 = sbr.rel (%p1828) target = $region112
      $region111: #{tpu_custom_call.1} parent=5 // pred_region
        %s1831 = ssub.s32 %s29, 2
        // Predicated region
        $region113: #{tpu_custom_call.1} parent=111 // pred_check
          %p1832 = pneg %p471
        $region114: #{tpu_custom_call.1} parent=111 // pred_check_branch
          %1834 = sbr.rel (%p1832) target = $region116
        $region115: #{tpu_custom_call.1} parent=111 // pred_region
          %s1835 = sand.u32 %s456, 1
          %s1836 = scalar_lea.sflag [#allocation5], %s1835
          %s1837 = sand.u32 %s456, 1
          %s1838 = smul.addr %s1837, 16
          %s1839 = scalar_lea.vmem [#allocation9], %s1838
          %1840 = dma.done %s1836, 256
        $region116: #{tpu_custom_call.1} parent=111 // pred_fallthru
          _
      $region112: #{tpu_custom_call.1} parent=5 // pred_fallthru
        _
    $region6: #{tpu_custom_call.1} parent=1 // loop_footer
      %s33 = sadd.s32 1, %s29
    $region7: #{tpu_custom_call.1} parent=1 // loop_footer_branch
      %28 = sbr.rel target = $region3
    $region8: #{tpu_custom_call.1} parent=1 // loop_exit
      _
    %1841 = vsyncpa [#allocation4], 1
    %s1842 = scalar_lea.sflag [#allocation4], 1
    %1843 = vsyncpa %s1842, 1
    %1844 = vsyncpa [#allocation7], 1
    %s1845 = scalar_lea.sflag [#allocation7], 1
    %1846 = vsyncpa %s1845, 1
    %1847 = vsyncpa [#allocation5], 1
    %s1848 = scalar_lea.sflag [#allocation5], 1
    %1849 = vsyncpa %s1848, 1

</llo_original>
